<compile_context>
chip_gen: v6e
topology: v6e:2x2x1
jax: 0.10.0
libtpu: 0.0.40
codegen_flags: <defaults>
</compile_context>

<pallas_src>
import functools

import jax
import jax.numpy as jnp
from jax import lax
from jax.experimental import pallas as pl
from jax.experimental.pallas import tpu as pltpu


def _round_up(v, m):
    return ((v + m - 1) // m) * m


def _cdiv(a, b):
    return -(-a // b)


def _mlp_kernel(n_layers, last_op, last_vpu, n_chunks, cn, unroll, *refs):
    """Fused per-point MLP; all layers applied per `cn`-lane chunk.

    refs = (x_ref, w0, b0, w1, b1, ..., o_ref)
      x_ref : (1, C0, tn)   f32, lane-dense point tile
      w_l   : (C_{l+1}, C_l) bf16    (last layer: (C_l, 1) f32 when last_vpu)
      b_l   : (C_{l+1}, 1)  f32
      o_ref : (1, C_last, tn)
    """
    x_ref = refs[0]
    o_ref = refs[-1]
    wb = refs[1:-1]

    # Weights/biases have constant index_maps -> VMEM-resident across the whole
    # grid; load once per grid step and reuse across the chunk loop.
    ws = [wb[2 * l][...] for l in range(n_layers)]
    bs = [wb[2 * l + 1][...] for l in range(n_layers)]

    def chunk_body(c, carry):
        off = pl.multiple_of(c * cn, 128)
        y = x_ref[0, :, pl.ds(off, cn)].astype(jnp.float32)          # (C0, cn)
        for l in range(n_layers):
            if l == n_layers - 1 and last_vpu:
                # C_out == 1: VPU multiply + sublane(channel) reduction — skips
                # an M=1 MXU weight push/pop and keeps full f32 precision.
                y = jnp.sum(ws[l] * y, axis=0, keepdims=True) + bs[l]
            else:
                # bf16 operands into the MXU, f32 accumulation.
                y = jnp.dot(ws[l], y.astype(jnp.bfloat16),
                            preferred_element_type=jnp.float32) + bs[l]
            if l != n_layers - 1:
                y = jnp.where(y > 0, y, 0.01 * y)    # F.leaky_relu (slope 0.01)
        if last_op == "sigmoid":
            y = jax.nn.sigmoid(y)                    # EUP; f32 epilogue (v5e-safe)
        o_ref[0, :, pl.ds(off, cn)] = y.astype(o_ref.dtype)
        return carry

    lax.fori_loop(0, n_chunks, chunk_body, 0, unroll=unroll)


def _select_tiles(B, N, tile_n, min_programs=2):
    """Lane-align N, then pick balanced point tiles (no pad-to-tile-multiple)."""
    n_pad = _round_up(N, 128)                    # only 128-lane alignment padding
    grid_n = _cdiv(n_pad, tile_n)                # min #point-tiles for the cap
    if B * grid_n < min_programs:                # keep v7x's 2nd TensorCore busy
        grid_n = min(_cdiv(min_programs, B), n_pad // 128)
    tn = _round_up(_cdiv(n_pad, grid_n), 128)    # balanced, lane-aligned tiles
    grid_n = _cdiv(n_pad, tn)                    # ragged last block is OK
    cn = next(c for c in (512, 384, 256, 128) if tn % c == 0)
    return n_pad, tn, grid_n, cn


def surface_classifier_forward(feature, weights, biases, *, last_op="sigmoid",
                               tile_n=8192):
    """SurfaceClassifier (no_residual=True, num_views=1) forward.

    feature: (B, C0, N) float32
    weights[l]: (C_{l+1}, C_l, 1)  (PyTorch Conv1d weight shape)
    biases[l]:  (C_{l+1},)
    """
    B, C0, N = feature.shape
    n_layers = len(weights)
    c_out = weights[-1].shape[0]
    last_vpu = (c_out == 1)

    n_pad, tn, grid_n, cn = _select_tiles(B, N, tile_n)
    x = feature
    if n_pad != N:
        x = jnp.pad(feature, ((0, 0), (0, 0), (0, n_pad - N)))

    wb_args, wb_specs = [], []
    for l, (w, b) in enumerate(zip(weights, biases)):
        w2 = w.reshape(w.shape[0], w.shape[1])
        if l == n_layers - 1 and last_vpu:
            w2 = w2.astype(jnp.float32).T            # (C_in, 1) f32 for VPU path
        else:
            w2 = w2.astype(jnp.bfloat16)             # bf16 MXU operand
        b2 = b.reshape(-1, 1).astype(jnp.float32)
        wb_args += [w2, b2]
        wb_specs += [
            pl.BlockSpec(w2.shape, lambda i, j: (0, 0)),   # resident across grid
            pl.BlockSpec(b2.shape, lambda i, j: (0, 0)),
        ]

    flops = 2 * B * N * sum(int(w.shape[0]) * int(w.shape[1]) for w in weights)
    transcendentals = B * N * c_out if last_op == "sigmoid" else 0
    bytes_accessed = 4 * B * n_pad * (C0 + c_out) + sum(
        int(a.size) * int(a.dtype.itemsize) for a in wb_args)

    n_chunks = tn // cn
    kernel = functools.partial(_mlp_kernel, n_layers, last_op, last_vpu,
                               n_chunks, cn, min(8, n_chunks))

    out = pl.pallas_call(
        kernel,
        out_shape=jax.ShapeDtypeStruct((B, c_out, n_pad), feature.dtype),
        grid=(B, grid_n),
        in_specs=[pl.BlockSpec((1, C0, tn), lambda i, j: (i, 0, j))] + wb_specs,
        out_specs=pl.BlockSpec((1, c_out, tn), lambda i, j: (i, 0, j)),
        compiler_params=pltpu.CompilerParams(
            dimension_semantics=("parallel", "parallel"),
            vmem_limit_bytes=32 * 1024 * 1024),
        cost_estimate=pl.CostEstimate(
            flops=flops, transcendentals=transcendentals,
            bytes_accessed=bytes_accessed),
    )(x, *wb_args)

    return out[:, :, :N] if n_pad != N else out


def _reference(x, weights, biases, *, last_op="sigmoid"):
    """Pure-JAX reference mirroring the kernel's numerics:
    bf16 MXU operands with f32 accumulation for hidden layers, exact f32
    elementwise-multiply + channel-sum for the final C_out==1 layer."""
    n_layers = len(weights)
    y = x
    for l in range(n_layers):
        w = weights[l].reshape(weights[l].shape[0], -1)
        b = biases[l][None, :, None]
        if l == n_layers - 1 and w.shape[0] == 1:
            y = jnp.sum(w.reshape(1, -1, 1) * y, axis=1, keepdims=True) + b
        else:
            y = jnp.einsum("oc,bcn->bon", w.astype(jnp.bfloat16),
                           y.astype(jnp.bfloat16),
                           preferred_element_type=jnp.float32) + b
        if l != n_layers - 1:
            y = jnp.where(y > 0, y, 0.01 * y)
    if last_op == "sigmoid":
        y = jax.nn.sigmoid(y)
    return y


if __name__ == "__main__":
    # SurfaceClassifier(filter_channels=[32, 64, 32, 16, 1], num_views=1,
    #                   no_residual=True, last_op=nn.Sigmoid()) on (B, C0, N).
    filter_channels = [32, 64, 32, 16, 1]
    key = jax.random.PRNGKey(0)

    weights, biases = [], []
    for l in range(len(filter_channels) - 1):
        cin, cout = filter_channels[l], filter_channels[l + 1]
        kw, kb, key = jax.random.split(key, 3)
        bound = 1.0 / (cin ** 0.5)
        weights.append(jax.random.uniform(kw, (cout, cin, 1), jnp.float32,
                                          -bound, bound))
        biases.append(jax.random.uniform(kb, (cout,), jnp.float32, -bound, bound))

    # Two configs: (2, 1000) exercises lane padding + multi-batch grid;
    # (1, 1300) exercises the >=2-program (v7x) split and a ragged last tile.
    for (B, N) in [(2, 1000), (1, 1300)]:
        kx, key = jax.random.split(key)
        x = jax.random.normal(kx, (B, filter_channels[0], N), dtype=jnp.float32)

        y = surface_classifier_forward(x, weights, biases, last_op="sigmoid")
        jax.block_until_ready(y)

        ref = _reference(x, weights, biases, last_op="sigmoid")
        assert y.shape == ref.shape
        assert jnp.allclose(y, ref, atol=2e-3, rtol=2e-3), (
            f"mismatch vs JAX reference for B={B}, N={N}")

    print("KERNEL_OK")
</pallas_src>

<mosaic_0001>
module attributes {stable_mosaic.version = 11 : i64} {
  func.func @_mlp_kernel(%arg0: i32, %arg1: i32, %arg2: memref<1x32x1024xf32, #tpu.memory_space<vmem>>, %arg3: memref<64x32xbf16, #tpu.memory_space<vmem>>, %arg4: memref<64x1xf32, #tpu.memory_space<vmem>>, %arg5: memref<32x64xbf16, #tpu.memory_space<vmem>>, %arg6: memref<32x1xf32, #tpu.memory_space<vmem>>, %arg7: memref<16x32xbf16, #tpu.memory_space<vmem>>, %arg8: memref<16x1xf32, #tpu.memory_space<vmem>>, %arg9: memref<16x1xf32, #tpu.memory_space<vmem>>, %arg10: memref<1x1xf32, #tpu.memory_space<vmem>>, %arg11: memref<1x1x1024xf32, #tpu.memory_space<vmem>>) attributes {dimension_semantics = [#tpu.dimension_semantics<parallel>, #tpu.dimension_semantics<parallel>], iteration_bounds = array<i64: 2, 1>, scalar_prefetch = 0 : i64, scratch_operands = 0 : i64, tpu.core_type = #tpu.core_type<tc>, window_params = [{transform_indices = @transform_0, window_bounds = array<i64: 1, 32, 1024>}, {pipeline_mode = #tpu.pipeline_mode<synchronous>, transform_indices = @transform_1, window_bounds = array<i64: 64, 32>}, {pipeline_mode = #tpu.pipeline_mode<synchronous>, transform_indices = @transform_2, window_bounds = array<i64: 64, 1>}, {pipeline_mode = #tpu.pipeline_mode<synchronous>, transform_indices = @transform_3, window_bounds = array<i64: 32, 64>}, {pipeline_mode = #tpu.pipeline_mode<synchronous>, transform_indices = @transform_4, window_bounds = array<i64: 32, 1>}, {pipeline_mode = #tpu.pipeline_mode<synchronous>, transform_indices = @transform_5, window_bounds = array<i64: 16, 32>}, {pipeline_mode = #tpu.pipeline_mode<synchronous>, transform_indices = @transform_6, window_bounds = array<i64: 16, 1>}, {pipeline_mode = #tpu.pipeline_mode<synchronous>, transform_indices = @transform_7, window_bounds = array<i64: 16, 1>}, {pipeline_mode = #tpu.pipeline_mode<synchronous>, transform_indices = @transform_8, window_bounds = array<i64: 1, 1>}, {transform_indices = @transform_9, window_bounds = array<i64: 1, 1, 1024>}]} {
    %c0 = arith.constant 0 : index
    %c0_0 = arith.constant 0 : index
    %0 = vector.load %arg3[%c0, %c0_0] : memref<64x32xbf16, #tpu.memory_space<vmem>>, vector<64x32xbf16>
    %c0_1 = arith.constant 0 : index
    %c0_2 = arith.constant 0 : index
    %1 = vector.load %arg5[%c0_1, %c0_2] : memref<32x64xbf16, #tpu.memory_space<vmem>>, vector<32x64xbf16>
    %c0_3 = arith.constant 0 : index
    %c0_4 = arith.constant 0 : index
    %2 = vector.load %arg7[%c0_3, %c0_4] : memref<16x32xbf16, #tpu.memory_space<vmem>>, vector<16x32xbf16>
    %c0_5 = arith.constant 0 : index
    %c0_6 = arith.constant 0 : index
    %3 = vector.load %arg9[%c0_5, %c0_6] : memref<16x1xf32, #tpu.memory_space<vmem>>, vector<16x1xf32>
    %c0_7 = arith.constant 0 : index
    %c0_8 = arith.constant 0 : index
    %4 = vector.load %arg4[%c0_7, %c0_8] : memref<64x1xf32, #tpu.memory_space<vmem>>, vector<64x1xf32>
    %c0_9 = arith.constant 0 : index
    %c0_10 = arith.constant 0 : index
    %5 = vector.load %arg6[%c0_9, %c0_10] : memref<32x1xf32, #tpu.memory_space<vmem>>, vector<32x1xf32>
    %c0_11 = arith.constant 0 : index
    %c0_12 = arith.constant 0 : index
    %6 = vector.load %arg8[%c0_11, %c0_12] : memref<16x1xf32, #tpu.memory_space<vmem>>, vector<16x1xf32>
    %c0_13 = arith.constant 0 : index
    %c0_14 = arith.constant 0 : index
    %7 = vector.load %arg10[%c0_13, %c0_14] : memref<1x1xf32, #tpu.memory_space<vmem>>, vector<1x1xf32>
    %c0_i32 = arith.constant 0 : i32
    %c512_i32 = arith.constant 512 : i32
    %8 = arith.muli %c0_i32, %c512_i32 : i32
    %9 = tpu.assume_multiple %8, 128 : i32
    %c0_15 = arith.constant 0 : index
    %c0_16 = arith.constant 0 : index
    %10 = arith.index_cast %9 : i32 to index
    %11 = vector.load %arg2[%c0_15, %c0_16, %10] : memref<1x32x1024xf32, #tpu.memory_space<vmem>>, vector<1x32x512xf32>
    %12 = vector.shape_cast %11 : vector<1x32x512xf32> to vector<32x512xf32>
    %13 = arith.truncf %12 : vector<32x512xf32> to vector<32x512xbf16>
    %cst = arith.constant dense<0.000000e+00> : vector<64x512xf32>
    %14 = tpu.matmul %0, %13, %cst {dimension_numbers = #tpu.dot_dimension_numbers<[1], [0], [0], [1], [0, 0, 1, 1], [], []>} : vector<64x32xbf16>, vector<32x512xbf16>, vector<64x512xf32> -> vector<64x512xf32>
    %15 = vector.broadcast %4 : vector<64x1xf32> to vector<64x512xf32>
    %16 = arith.addf %14, %15 : vector<64x512xf32>
    %cst_17 = arith.constant 0.000000e+00 : f32
    %17 = vector.broadcast %cst_17 : f32 to vector<64x512xf32>
    %18 = arith.cmpf ogt, %16, %17 : vector<64x512xf32>
    %cst_18 = arith.constant 0.00999999977 : f32
    %19 = vector.broadcast %cst_18 : f32 to vector<64x512xf32>
    %20 = arith.mulf %19, %16 : vector<64x512xf32>
    %21 = arith.select %18, %16, %20 : vector<64x512xi1>, vector<64x512xf32>
    %22 = arith.truncf %21 : vector<64x512xf32> to vector<64x512xbf16>
    %cst_19 = arith.constant dense<0.000000e+00> : vector<32x512xf32>
    %23 = tpu.matmul %1, %22, %cst_19 {dimension_numbers = #tpu.dot_dimension_numbers<[1], [0], [0], [1], [0, 0, 1, 1], [], []>} : vector<32x64xbf16>, vector<64x512xbf16>, vector<32x512xf32> -> vector<32x512xf32>
    %24 = vector.broadcast %5 : vector<32x1xf32> to vector<32x512xf32>
    %25 = arith.addf %23, %24 : vector<32x512xf32>
    %cst_20 = arith.constant 0.000000e+00 : f32
    %26 = vector.broadcast %cst_20 : f32 to vector<32x512xf32>
    %27 = arith.cmpf ogt, %25, %26 : vector<32x512xf32>
    %cst_21 = arith.constant 0.00999999977 : f32
    %28 = vector.broadcast %cst_21 : f32 to vector<32x512xf32>
    %29 = arith.mulf %28, %25 : vector<32x512xf32>
    %30 = arith.select %27, %25, %29 : vector<32x512xi1>, vector<32x512xf32>
    %31 = arith.truncf %30 : vector<32x512xf32> to vector<32x512xbf16>
    %cst_22 = arith.constant dense<0.000000e+00> : vector<16x512xf32>
    %32 = tpu.matmul %2, %31, %cst_22 {dimension_numbers = #tpu.dot_dimension_numbers<[1], [0], [0], [1], [0, 0, 1, 1], [], []>} : vector<16x32xbf16>, vector<32x512xbf16>, vector<16x512xf32> -> vector<16x512xf32>
    %33 = vector.broadcast %6 : vector<16x1xf32> to vector<16x512xf32>
    %34 = arith.addf %32, %33 : vector<16x512xf32>
    %cst_23 = arith.constant 0.000000e+00 : f32
    %35 = vector.broadcast %cst_23 : f32 to vector<16x512xf32>
    %36 = arith.cmpf ogt, %34, %35 : vector<16x512xf32>
    %cst_24 = arith.constant 0.00999999977 : f32
    %37 = vector.broadcast %cst_24 : f32 to vector<16x512xf32>
    %38 = arith.mulf %37, %34 : vector<16x512xf32>
    %39 = arith.select %36, %34, %38 : vector<16x512xi1>, vector<16x512xf32>
    %40 = vector.broadcast %3 : vector<16x1xf32> to vector<16x512xf32>
    %41 = arith.mulf %40, %39 : vector<16x512xf32>
    %cst_25 = arith.constant dense<0.000000e+00> : vector<512xf32>
    %42 = vector.multi_reduction <add>, %41, %cst_25 [0] : vector<16x512xf32> to vector<512xf32>
    %43 = vector.shape_cast %42 : vector<512xf32> to vector<1x512xf32>
    %44 = vector.broadcast %7 : vector<1x1xf32> to vector<1x512xf32>
    %45 = arith.addf %43, %44 : vector<1x512xf32>
    %46 = arith.negf %45 : vector<1x512xf32>
    %47 = math.exp %46 : vector<1x512xf32>
    %cst_26 = arith.constant 1.000000e+00 : f32
    %48 = vector.broadcast %cst_26 : f32 to vector<1x512xf32>
    %49 = arith.addf %48, %47 : vector<1x512xf32>
    %50 = arith.divf %48, %49 : vector<1x512xf32>
    %c0_27 = arith.constant 0 : index
    %c0_28 = arith.constant 0 : index
    %51 = arith.index_cast %9 : i32 to index
    %52 = vector.load %arg11[%c0_27, %c0_28, %51] : memref<1x1x1024xf32, #tpu.memory_space<vmem>>, vector<1x1x512xf32>
    %53 = vector.shape_cast %52 : vector<1x1x512xf32> to vector<1x512xf32>
    %54 = vector.shape_cast %50 : vector<1x512xf32> to vector<1x1x512xf32>
    tpu.vector_store %arg11[%c0_27, %c0_28, %51], %54 {strides = array<i32>} : memref<1x1x1024xf32, #tpu.memory_space<vmem>>, vector<1x1x512xf32>,
    %c1_i32 = arith.constant 1 : i32
    %c512_i32_29 = arith.constant 512 : i32
    %55 = arith.muli %c1_i32, %c512_i32_29 : i32
    %56 = tpu.assume_multiple %55, 128 : i32
    %c0_30 = arith.constant 0 : index
    %c0_31 = arith.constant 0 : index
    %57 = arith.index_cast %56 : i32 to index
    %58 = vector.load %arg2[%c0_30, %c0_31, %57] : memref<1x32x1024xf32, #tpu.memory_space<vmem>>, vector<1x32x512xf32>
    %59 = vector.shape_cast %58 : vector<1x32x512xf32> to vector<32x512xf32>
    %60 = arith.truncf %59 : vector<32x512xf32> to vector<32x512xbf16>
    %cst_32 = arith.constant dense<0.000000e+00> : vector<64x512xf32>
    %61 = tpu.matmul %0, %60, %cst_32 {dimension_numbers = #tpu.dot_dimension_numbers<[1], [0], [0], [1], [0, 0, 1, 1], [], []>} : vector<64x32xbf16>, vector<32x512xbf16>, vector<64x512xf32> -> vector<64x512xf32>
    %62 = vector.broadcast %4 : vector<64x1xf32> to vector<64x512xf32>
    %63 = arith.addf %61, %62 : vector<64x512xf32>
    %cst_33 = arith.constant 0.000000e+00 : f32
    %64 = vector.broadcast %cst_33 : f32 to vector<64x512xf32>
    %65 = arith.cmpf ogt, %63, %64 : vector<64x512xf32>
    %cst_34 = arith.constant 0.00999999977 : f32
    %66 = vector.broadcast %cst_34 : f32 to vector<64x512xf32>
    %67 = arith.mulf %66, %63 : vector<64x512xf32>
    %68 = arith.select %65, %63, %67 : vector<64x512xi1>, vector<64x512xf32>
    %69 = arith.truncf %68 : vector<64x512xf32> to vector<64x512xbf16>
    %cst_35 = arith.constant dense<0.000000e+00> : vector<32x512xf32>
    %70 = tpu.matmul %1, %69, %cst_35 {dimension_numbers = #tpu.dot_dimension_numbers<[1], [0], [0], [1], [0, 0, 1, 1], [], []>} : vector<32x64xbf16>, vector<64x512xbf16>, vector<32x512xf32> -> vector<32x512xf32>
    %71 = vector.broadcast %5 : vector<32x1xf32> to vector<32x512xf32>
    %72 = arith.addf %70, %71 : vector<32x512xf32>
    %cst_36 = arith.constant 0.000000e+00 : f32
    %73 = vector.broadcast %cst_36 : f32 to vector<32x512xf32>
    %74 = arith.cmpf ogt, %72, %73 : vector<32x512xf32>
    %cst_37 = arith.constant 0.00999999977 : f32
    %75 = vector.broadcast %cst_37 : f32 to vector<32x512xf32>
    %76 = arith.mulf %75, %72 : vector<32x512xf32>
    %77 = arith.select %74, %72, %76 : vector<32x512xi1>, vector<32x512xf32>
    %78 = arith.truncf %77 : vector<32x512xf32> to vector<32x512xbf16>
    %cst_38 = arith.constant dense<0.000000e+00> : vector<16x512xf32>
    %79 = tpu.matmul %2, %78, %cst_38 {dimension_numbers = #tpu.dot_dimension_numbers<[1], [0], [0], [1], [0, 0, 1, 1], [], []>} : vector<16x32xbf16>, vector<32x512xbf16>, vector<16x512xf32> -> vector<16x512xf32>
    %80 = vector.broadcast %6 : vector<16x1xf32> to vector<16x512xf32>
    %81 = arith.addf %79, %80 : vector<16x512xf32>
    %cst_39 = arith.constant 0.000000e+00 : f32
    %82 = vector.broadcast %cst_39 : f32 to vector<16x512xf32>
    %83 = arith.cmpf ogt, %81, %82 : vector<16x512xf32>
    %cst_40 = arith.constant 0.00999999977 : f32
    %84 = vector.broadcast %cst_40 : f32 to vector<16x512xf32>
    %85 = arith.mulf %84, %81 : vector<16x512xf32>
    %86 = arith.select %83, %81, %85 : vector<16x512xi1>, vector<16x512xf32>
    %87 = vector.broadcast %3 : vector<16x1xf32> to vector<16x512xf32>
    %88 = arith.mulf %87, %86 : vector<16x512xf32>
    %cst_41 = arith.constant dense<0.000000e+00> : vector<512xf32>
    %89 = vector.multi_reduction <add>, %88, %cst_41 [0] : vector<16x512xf32> to vector<512xf32>
    %90 = vector.shape_cast %89 : vector<512xf32> to vector<1x512xf32>
    %91 = vector.broadcast %7 : vector<1x1xf32> to vector<1x512xf32>
    %92 = arith.addf %90, %91 : vector<1x512xf32>
    %93 = arith.negf %92 : vector<1x512xf32>
    %94 = math.exp %93 : vector<1x512xf32>
    %cst_42 = arith.constant 1.000000e+00 : f32
    %95 = vector.broadcast %cst_42 : f32 to vector<1x512xf32>
    %96 = arith.addf %95, %94 : vector<1x512xf32>
    %97 = arith.divf %95, %96 : vector<1x512xf32>
    %c0_43 = arith.constant 0 : index
    %c0_44 = arith.constant 0 : index
    %98 = arith.index_cast %56 : i32 to index
    %99 = vector.load %arg11[%c0_43, %c0_44, %98] : memref<1x1x1024xf32, #tpu.memory_space<vmem>>, vector<1x1x512xf32>
    %100 = vector.shape_cast %99 : vector<1x1x512xf32> to vector<1x512xf32>
    %101 = vector.shape_cast %97 : vector<1x512xf32> to vector<1x1x512xf32>
    tpu.vector_store %arg11[%c0_43, %c0_44, %98], %101 {strides = array<i32>} : memref<1x1x1024xf32, #tpu.memory_space<vmem>>, vector<1x1x512xf32>,
    %c2_i32 = arith.constant 2 : i32
    return
  }
  func.func @transform_0(%arg0: i32, %arg1: i32) -> (i32, i32, i32) {
    %c0_i32 = arith.constant 0 : i32
    %c0_i32_0 = arith.constant 0 : i32
    return %arg0, %c0_i32, %arg1 : i32, i32, i32
  }
  func.func @transform_1(%arg0: i32, %arg1: i32) -> (i32, i32) {
    %c0_i32 = arith.constant 0 : i32
    %c0_i32_0 = arith.constant 0 : i32
    %c0_i32_1 = arith.constant 0 : i32
    return %c0_i32, %c0_i32_0 : i32, i32
  }
  func.func @transform_2(%arg0: i32, %arg1: i32) -> (i32, i32) {
    %c0_i32 = arith.constant 0 : i32
    %c0_i32_0 = arith.constant 0 : i32
    %c0_i32_1 = arith.constant 0 : i32
    return %c0_i32, %c0_i32_0 : i32, i32
  }
  func.func @transform_3(%arg0: i32, %arg1: i32) -> (i32, i32) {
    %c0_i32 = arith.constant 0 : i32
    %c0_i32_0 = arith.constant 0 : i32
    %c0_i32_1 = arith.constant 0 : i32
    return %c0_i32, %c0_i32_0 : i32, i32
  }
  func.func @transform_4(%arg0: i32, %arg1: i32) -> (i32, i32) {
    %c0_i32 = arith.constant 0 : i32
    %c0_i32_0 = arith.constant 0 : i32
    %c0_i32_1 = arith.constant 0 : i32
    return %c0_i32, %c0_i32_0 : i32, i32
  }
  func.func @transform_5(%arg0: i32, %arg1: i32) -> (i32, i32) {
    %c0_i32 = arith.constant 0 : i32
    %c0_i32_0 = arith.constant 0 : i32
    %c0_i32_1 = arith.constant 0 : i32
    return %c0_i32, %c0_i32_0 : i32, i32
  }
  func.func @transform_6(%arg0: i32, %arg1: i32) -> (i32, i32) {
    %c0_i32 = arith.constant 0 : i32
    %c0_i32_0 = arith.constant 0 : i32
    %c0_i32_1 = arith.constant 0 : i32
    return %c0_i32, %c0_i32_0 : i32, i32
  }
  func.func @transform_7(%arg0: i32, %arg1: i32) -> (i32, i32) {
    %c0_i32 = arith.constant 0 : i32
    %c0_i32_0 = arith.constant 0 : i32
    %c0_i32_1 = arith.constant 0 : i32
    return %c0_i32, %c0_i32_0 : i32, i32
  }
  func.func @transform_8(%arg0: i32, %arg1: i32) -> (i32, i32) {
    %c0_i32 = arith.constant 0 : i32
    %c0_i32_0 = arith.constant 0 : i32
    %c0_i32_1 = arith.constant 0 : i32
    return %c0_i32, %c0_i32_0 : i32, i32
  }
  func.func @transform_9(%arg0: i32, %arg1: i32) -> (i32, i32, i32) {
    %c0_i32 = arith.constant 0 : i32
    %c0_i32_0 = arith.constant 0 : i32
    return %arg0, %c0_i32, %arg1 : i32, i32, i32
  }
}

</mosaic_0001>

<llo_original>
// kernel: tpu_custom_call.1
$region0: #{tpu_custom_call.1}
  #allocation0 [shape = 'u32[]', space=smem, size = 0x4, offset = 0x4, fixed_abs, tag = 'smem constant byte address 0x4 - core index']
  #allocation1 [shape = 'u32[144,128]{1,0:T(1,128)}', space=vmem, size = 0x12000, scoped, tag = 'internal scratch']
  #allocation2 [shape = 'f32[1,1]{1,0:T(1,128)S(1)}', space=vmem, size = 0x200, scoped, tag = 'scoped memory for tpu_custom_call.1']
  %s0 = inlined_call_operand.hbm [shape: f32[2,32,1024], index: 0, kind: input, shape index: {}]
  %s1 = inlined_call_operand.vmem [shape: bf16[64,32], index: 1, kind: input, shape index: {}]
  %s2 = inlined_call_operand.vmem [shape: f32[64,1], index: 2, kind: input, shape index: {}]
  %s3 = inlined_call_operand.vmem [shape: bf16[32,64], index: 3, kind: input, shape index: {}]
  %s4 = inlined_call_operand.vmem [shape: f32[32,1], index: 4, kind: input, shape index: {}]
  %s5 = inlined_call_operand.vmem [shape: bf16[16,32], index: 5, kind: input, shape index: {}]
  %s6 = inlined_call_operand.vmem [shape: f32[16,1], index: 6, kind: input, shape index: {}]
  %s7 = inlined_call_operand.vmem [shape: f32[16,1], index: 7, kind: input, shape index: {}]
  %s8 = inlined_call_operand.<no memory space> [shape: f32[1,1], index: 8, kind: input, shape index: {}]
  %s9 = inlined_call_operand.hbm [shape: f32[2,1,1024], index: 9, kind: output, shape index: {}]
  %s10 = sld [smem:[#allocation0]]
  $region73: #{tpu_custom_call.1} parent=0
    _
  %s12 = ssub.s32 1, %s10
  %s13 = scalar_select 0, %s12, %s10
  %v14 = vstv %s8
  %15 = vst [vmem:[#allocation2] sm:$0x1] %v14
  $region1: #{tpu_custom_call.1} parent=0
    #allocation3 [shape = 'u8[262144]{0}', space=vmem, size = 0x40000, scoped, tag = 'input window, operand 0']
    #allocation4 [shape = 's32[2]{0}', space=sflag, size = 0x8, scoped, tag = 'scoped memory for tpu_custom_call.1']
    #allocation5 [shape = 's32[2]{0}', space=sflag, size = 0x8, scoped, tag = 'scoped memory for tpu_custom_call.1']
    #allocation6 [shape = 'u8[8192]{0}', space=vmem, size = 0x2000, scoped, tag = 'output window, operand 0']
    %16 = vsyncpa [#allocation4], 0
    %s17 = scalar_lea.sflag [#allocation4], 1
    %18 = vsyncpa %s17, 0
    %19 = vsyncpa [#allocation5], 0
    %s20 = scalar_lea.sflag [#allocation5], 1
    %21 = vsyncpa %s20, 0
    loop: start=0, step=1, limit=4
    $region2: #{tpu_custom_call.1} parent=1 // loop_pre_header
      _
    $region3: #{tpu_custom_call.1} parent=1 // loop_header
      %s23 = sphi 0, %s27
      %p24 = scmp.ge.s32.totalorder %s23, 4
      %s30 = sphi 0, %s42
      %s31 = sphi 0, %s38
      %s32 = sphi 0, %s30
      %s33 = sphi 0, %s31
      %s34 = sphi 0, %s32
      %s35 = sphi 0, %s33
      %s47 = sphi 0, %s49
      %s50 = sphi 0, %s47
      %s51 = sphi 0, %s50
      %s67 = sphi 0, %s51
      %s71 = sphi 0, %s71
      %s73 = sphi 0, %s71
      %s74 = sphi 0, %s73
      %s88 = sphi 0, %s74
      %s92 = sphi 0, %s92
      %s94 = sphi 0, %s92
      %s95 = sphi 0, %s94
      %s109 = sphi 0, %s95
      %s113 = sphi 0, %s113
      %s115 = sphi 0, %s113
      %s116 = sphi 0, %s115
      %s130 = sphi 0, %s116
      %s134 = sphi 0, %s134
      %s136 = sphi 0, %s134
      %s137 = sphi 0, %s136
      %s151 = sphi 0, %s137
      %s155 = sphi 0, %s155
      %s157 = sphi 0, %s155
      %s158 = sphi 0, %s157
      %s172 = sphi 0, %s158
      %s176 = sphi 0, %s176
      %s178 = sphi 0, %s176
      %s179 = sphi 0, %s178
      %s193 = sphi 0, %s179
      %s197 = sphi 0, %s197
      %s199 = sphi 0, %s197
      %s200 = sphi 0, %s199
      %s214 = sphi 0, %s200
      %s218 = sphi 0, %s218
      %s220 = sphi 0, %s218
      %s221 = sphi 0, %s220
      %s235 = sphi 0, %s221
      %s243 = sphi 0, %s245
      %s246 = sphi 0, %s243
      %s247 = sphi 0, %s246
      %s263 = sphi 0, %s247
    $region4: #{tpu_custom_call.1} parent=1 // loop_header_branch
      %26 = sbr.rel (%p24) target = $region8
    $region5: #{tpu_custom_call.1} parent=1 // loop_body
      %s28 = ssub.s32 %s23, 1
      %s29 = ssub.s32 %s23, 2
      %s36 = sadd.s32 1, %s31
      %p37 = scmp.ge.s32.totalorder %s36, 1
      %s38 = scalar_select %p37, 0, %s36
      %s39 = sadd.s32 1, %s30
      %s40 = scalar_select %p37, %s39, %s30
      %p41 = scmp.ge.s32.totalorder %s40, 2
      %s42 = scalar_select %p41, 0, %s40
      %s43 = ssub.s32 %s30, %s42
      %s44 = ssub.s32 %s31, %s38
      %s45 = sor.u32 %s43, %s44
      %p46 = scmp.eq.s32.totalorder %s45, 0
      %s48 = sadd.s32 %s47, 1
      %s49 = scalar_select %p46, %s47, %s48
      %p52 = pneg %p46
      %p53 = scmp.eq.s32.totalorder %s23, 1
      %p54 = por %p52, %p53
      %p55 = scmp.ne.s32.totalorder %s47, %s50
      %p56 = scmp.eq.s32.totalorder %s23, 0
      %p57 = por %p55, %p56
      %p58 = scmp.ne.s32.totalorder %s47, %s50
      %p59 = scmp.eq.s32.totalorder %s28, 1
      %p60 = por %p58, %p59
      %p61 = scmp.ne.s32.totalorder %s50, %s51
      %p62 = scmp.eq.s32.totalorder %s28, 0
      %p63 = por %p61, %p62
      %p64 = scmp.ne.s32.totalorder %s50, %s51
      %p65 = scmp.eq.s32.totalorder %s29, 1
      %p66 = por %p64, %p65
      %p68 = scmp.ne.s32.totalorder %s51, %s67
      %p69 = scmp.eq.s32.totalorder %s29, 0
      %p70 = por %p68, %p69
      %s72 = sadd.s32 %s71, 1
      %p75 = scmp.eq.s32.totalorder %s23, 1
      %p76 = scmp.ne.s32.totalorder %s71, %s73
      %p77 = scmp.eq.s32.totalorder %s23, 0
      %p78 = por %p76, %p77
      %p79 = scmp.ne.s32.totalorder %s71, %s73
      %p80 = scmp.eq.s32.totalorder %s28, 1
      %p81 = por %p79, %p80
      %p82 = scmp.ne.s32.totalorder %s73, %s74
      %p83 = scmp.eq.s32.totalorder %s28, 0
      %p84 = por %p82, %p83
      %p85 = scmp.ne.s32.totalorder %s73, %s74
      %p86 = scmp.eq.s32.totalorder %s29, 1
      %p87 = por %p85, %p86
      %p89 = scmp.ne.s32.totalorder %s74, %s88
      %p90 = scmp.eq.s32.totalorder %s29, 0
      %p91 = por %p89, %p90
      %s93 = sadd.s32 %s92, 1
      %p96 = scmp.eq.s32.totalorder %s23, 1
      %p97 = scmp.ne.s32.totalorder %s92, %s94
      %p98 = scmp.eq.s32.totalorder %s23, 0
      %p99 = por %p97, %p98
      %p100 = scmp.ne.s32.totalorder %s92, %s94
      %p101 = scmp.eq.s32.totalorder %s28, 1
      %p102 = por %p100, %p101
      %p103 = scmp.ne.s32.totalorder %s94, %s95
      %p104 = scmp.eq.s32.totalorder %s28, 0
      %p105 = por %p103, %p104
      %p106 = scmp.ne.s32.totalorder %s94, %s95
      %p107 = scmp.eq.s32.totalorder %s29, 1
      %p108 = por %p106, %p107
      %p110 = scmp.ne.s32.totalorder %s95, %s109
      %p111 = scmp.eq.s32.totalorder %s29, 0
      %p112 = por %p110, %p111
      %s114 = sadd.s32 %s113, 1
      %p117 = scmp.eq.s32.totalorder %s23, 1
      %p118 = scmp.ne.s32.totalorder %s113, %s115
      %p119 = scmp.eq.s32.totalorder %s23, 0
      %p120 = por %p118, %p119
      %p121 = scmp.ne.s32.totalorder %s113, %s115
      %p122 = scmp.eq.s32.totalorder %s28, 1
      %p123 = por %p121, %p122
      %p124 = scmp.ne.s32.totalorder %s115, %s116
      %p125 = scmp.eq.s32.totalorder %s28, 0
      %p126 = por %p124, %p125
      %p127 = scmp.ne.s32.totalorder %s115, %s116
      %p128 = scmp.eq.s32.totalorder %s29, 1
      %p129 = por %p127, %p128
      %p131 = scmp.ne.s32.totalorder %s116, %s130
      %p132 = scmp.eq.s32.totalorder %s29, 0
      %p133 = por %p131, %p132
      %s135 = sadd.s32 %s134, 1
      %p138 = scmp.eq.s32.totalorder %s23, 1
      %p139 = scmp.ne.s32.totalorder %s134, %s136
      %p140 = scmp.eq.s32.totalorder %s23, 0
      %p141 = por %p139, %p140
      %p142 = scmp.ne.s32.totalorder %s134, %s136
      %p143 = scmp.eq.s32.totalorder %s28, 1
      %p144 = por %p142, %p143
      %p145 = scmp.ne.s32.totalorder %s136, %s137
      %p146 = scmp.eq.s32.totalorder %s28, 0
      %p147 = por %p145, %p146
      %p148 = scmp.ne.s32.totalorder %s136, %s137
      %p149 = scmp.eq.s32.totalorder %s29, 1
      %p150 = por %p148, %p149
      %p152 = scmp.ne.s32.totalorder %s137, %s151
      %p153 = scmp.eq.s32.totalorder %s29, 0
      %p154 = por %p152, %p153
      %s156 = sadd.s32 %s155, 1
      %p159 = scmp.eq.s32.totalorder %s23, 1
      %p160 = scmp.ne.s32.totalorder %s155, %s157
      %p161 = scmp.eq.s32.totalorder %s23, 0
      %p162 = por %p160, %p161
      %p163 = scmp.ne.s32.totalorder %s155, %s157
      %p164 = scmp.eq.s32.totalorder %s28, 1
      %p165 = por %p163, %p164
      %p166 = scmp.ne.s32.totalorder %s157, %s158
      %p167 = scmp.eq.s32.totalorder %s28, 0
      %p168 = por %p166, %p167
      %p169 = scmp.ne.s32.totalorder %s157, %s158
      %p170 = scmp.eq.s32.totalorder %s29, 1
      %p171 = por %p169, %p170
      %p173 = scmp.ne.s32.totalorder %s158, %s172
      %p174 = scmp.eq.s32.totalorder %s29, 0
      %p175 = por %p173, %p174
      %s177 = sadd.s32 %s176, 1
      %p180 = scmp.eq.s32.totalorder %s23, 1
      %p181 = scmp.ne.s32.totalorder %s176, %s178
      %p182 = scmp.eq.s32.totalorder %s23, 0
      %p183 = por %p181, %p182
      %p184 = scmp.ne.s32.totalorder %s176, %s178
      %p185 = scmp.eq.s32.totalorder %s28, 1
      %p186 = por %p184, %p185
      %p187 = scmp.ne.s32.totalorder %s178, %s179
      %p188 = scmp.eq.s32.totalorder %s28, 0
      %p189 = por %p187, %p188
      %p190 = scmp.ne.s32.totalorder %s178, %s179
      %p191 = scmp.eq.s32.totalorder %s29, 1
      %p192 = por %p190, %p191
      %p194 = scmp.ne.s32.totalorder %s179, %s193
      %p195 = scmp.eq.s32.totalorder %s29, 0
      %p196 = por %p194, %p195
      %s198 = sadd.s32 %s197, 1
      %p201 = scmp.eq.s32.totalorder %s23, 1
      %p202 = scmp.ne.s32.totalorder %s197, %s199
      %p203 = scmp.eq.s32.totalorder %s23, 0
      %p204 = por %p202, %p203
      %p205 = scmp.ne.s32.totalorder %s197, %s199
      %p206 = scmp.eq.s32.totalorder %s28, 1
      %p207 = por %p205, %p206
      %p208 = scmp.ne.s32.totalorder %s199, %s200
      %p209 = scmp.eq.s32.totalorder %s28, 0
      %p210 = por %p208, %p209
      %p211 = scmp.ne.s32.totalorder %s199, %s200
      %p212 = scmp.eq.s32.totalorder %s29, 1
      %p213 = por %p211, %p212
      %p215 = scmp.ne.s32.totalorder %s200, %s214
      %p216 = scmp.eq.s32.totalorder %s29, 0
      %p217 = por %p215, %p216
      %s219 = sadd.s32 %s218, 1
      %p222 = scmp.eq.s32.totalorder %s23, 1
      %p223 = scmp.ne.s32.totalorder %s218, %s220
      %p224 = scmp.eq.s32.totalorder %s23, 0
      %p225 = por %p223, %p224
      %p226 = scmp.ne.s32.totalorder %s218, %s220
      %p227 = scmp.eq.s32.totalorder %s28, 1
      %p228 = por %p226, %p227
      %p229 = scmp.ne.s32.totalorder %s220, %s221
      %p230 = scmp.eq.s32.totalorder %s28, 0
      %p231 = por %p229, %p230
      %p232 = scmp.ne.s32.totalorder %s220, %s221
      %p233 = scmp.eq.s32.totalorder %s29, 1
      %p234 = por %p232, %p233
      %p236 = scmp.ne.s32.totalorder %s221, %s235
      %p237 = scmp.eq.s32.totalorder %s29, 0
      %p238 = por %p236, %p237
      %s239 = ssub.s32 %s30, %s42
      %s240 = ssub.s32 %s31, %s38
      %s241 = sor.u32 %s239, %s240
      %p242 = scmp.eq.s32.totalorder %s241, 0
      %s244 = sadd.s32 %s243, 1
      %s245 = scalar_select %p242, %s243, %s244
      %p248 = pneg %p242
      %p249 = scmp.eq.s32.totalorder %s23, 1
      %p250 = por %p248, %p249
      %p251 = scmp.ne.s32.totalorder %s243, %s246
      %p252 = scmp.eq.s32.totalorder %s23, 0
      %p253 = por %p251, %p252
      %p254 = scmp.ne.s32.totalorder %s243, %s246
      %p255 = scmp.eq.s32.totalorder %s28, 1
      %p256 = por %p254, %p255
      %p257 = scmp.ne.s32.totalorder %s246, %s247
      %p258 = scmp.eq.s32.totalorder %s28, 0
      %p259 = por %p257, %p258
      %p260 = scmp.ne.s32.totalorder %s246, %s247
      %p261 = scmp.eq.s32.totalorder %s29, 1
      %p262 = por %p260, %p261
      %p264 = scmp.ne.s32.totalorder %s247, %s263
      %p265 = scmp.eq.s32.totalorder %s29, 0
      %p266 = por %p264, %p265
      %p267 = scmp.le.s32.totalorder 1, %s23
      %p268 = scmp.lt.s32.totalorder %s23, 3
      %p269 = pnand %p267, %p268
      %p270 = pneg %p269
      // Predicated region
      $region9: #{tpu_custom_call.1} parent=5 // pred_check
        _
      $region10: #{tpu_custom_call.1} parent=5 // pred_check_branch
        %272 = sbr.rel (%p269) target = $region12
      $region11: #{tpu_custom_call.1} parent=5 // pred_region
        %s273 = ssub.s32 %s23, 1
        // Predicated region
        $region13: #{tpu_custom_call.1} parent=11 // pred_check
          %p274 = pneg %p84
        $region14: #{tpu_custom_call.1} parent=11 // pred_check_branch
          %276 = sbr.rel (%p274) target = $region16
        $region15: #{tpu_custom_call.1} parent=11 // pred_region
          _
        $region16: #{tpu_custom_call.1} parent=11 // pred_fallthru
          _
        // Predicated region
        $region17: #{tpu_custom_call.1} parent=11 // pred_check
          %p277 = pneg %p105
        $region18: #{tpu_custom_call.1} parent=11 // pred_check_branch
          %279 = sbr.rel (%p277) target = $region20
        $region19: #{tpu_custom_call.1} parent=11 // pred_region
          _
        $region20: #{tpu_custom_call.1} parent=11 // pred_fallthru
          _
        // Predicated region
        $region21: #{tpu_custom_call.1} parent=11 // pred_check
          %p280 = pneg %p126
        $region22: #{tpu_custom_call.1} parent=11 // pred_check_branch
          %282 = sbr.rel (%p280) target = $region24
        $region23: #{tpu_custom_call.1} parent=11 // pred_region
          _
        $region24: #{tpu_custom_call.1} parent=11 // pred_fallthru
          _
        // Predicated region
        $region25: #{tpu_custom_call.1} parent=11 // pred_check
          %p283 = pneg %p147
        $region26: #{tpu_custom_call.1} parent=11 // pred_check_branch
          %285 = sbr.rel (%p283) target = $region28
        $region27: #{tpu_custom_call.1} parent=11 // pred_region
          _
        $region28: #{tpu_custom_call.1} parent=11 // pred_fallthru
          _
        // Predicated region
        $region29: #{tpu_custom_call.1} parent=11 // pred_check
          %p286 = pneg %p168
        $region30: #{tpu_custom_call.1} parent=11 // pred_check_branch
          %288 = sbr.rel (%p286) target = $region32
        $region31: #{tpu_custom_call.1} parent=11 // pred_region
          _
        $region32: #{tpu_custom_call.1} parent=11 // pred_fallthru
          _
        // Predicated region
        $region33: #{tpu_custom_call.1} parent=11 // pred_check
          %p289 = pneg %p189
        $region34: #{tpu_custom_call.1} parent=11 // pred_check_branch
          %291 = sbr.rel (%p289) target = $region36
        $region35: #{tpu_custom_call.1} parent=11 // pred_region
          _
        $region36: #{tpu_custom_call.1} parent=11 // pred_fallthru
          _
        // Predicated region
        $region37: #{tpu_custom_call.1} parent=11 // pred_check
          %p292 = pneg %p210
        $region38: #{tpu_custom_call.1} parent=11 // pred_check_branch
          %294 = sbr.rel (%p292) target = $region40
        $region39: #{tpu_custom_call.1} parent=11 // pred_region
          _
        $region40: #{tpu_custom_call.1} parent=11 // pred_fallthru
          _
        // Predicated region
        $region41: #{tpu_custom_call.1} parent=11 // pred_check
          %p295 = pneg %p231
        $region42: #{tpu_custom_call.1} parent=11 // pred_check_branch
          %297 = sbr.rel (%p295) target = $region44
        $region43: #{tpu_custom_call.1} parent=11 // pred_region
          _
        $region44: #{tpu_custom_call.1} parent=11 // pred_fallthru
          _
      $region12: #{tpu_custom_call.1} parent=5 // pred_fallthru
        _
      %p298 = scmp.lt.s32.totalorder %s23, 2
      // Predicated region
      $region45: #{tpu_custom_call.1} parent=5 // pred_check
        %p299 = pneg %p298
      $region46: #{tpu_custom_call.1} parent=5 // pred_check_branch
        %301 = sbr.rel (%p299) target = $region48
      $region47: #{tpu_custom_call.1} parent=5 // pred_region
        // Predicated region
        $region49: #{tpu_custom_call.1} parent=47 // pred_check
          %p302 = pneg %p57
        $region50: #{tpu_custom_call.1} parent=47 // pred_check_branch
          %304 = sbr.rel (%p302) target = $region52
        $region51: #{tpu_custom_call.1} parent=47 // pred_region
          %s305 = sand.u32 %s47, 1
          %s306 = scalar_lea.sflag [#allocation4], %s305
          %s307 = sand.u32 %s47, 1
          %s308 = smul.addr %s307, 256
          %s309 = scalar_lea.vmem [#allocation3], %s308
          %s310 = smul.u32 8, %s31
          %s312 = ssub.s32 4096, 4096
          %313 = vsyncadd %s306, %s312
          %s314 = smul.addr %s30, 32
          %s315 = sadd.s32 %s310, %s314
          %s316 = smul.addr %s315, 128
          %s317 = scalar_lea.hbm %s0, %s316
          %s318 = sshll.u32 %s309, 4
          %s319 = int_to_ptr.vmem [resolvable:$true] %s318
          %324 = dma.hbm_to_vmem [thread:$0]  %s317, 4096, %s319, %s306, 1024, 1024, 64
        $region52: #{tpu_custom_call.1} parent=47 // pred_fallthru
          _
      $region48: #{tpu_custom_call.1} parent=5 // pred_fallthru
        _
      %p325 = scmp.le.s32.totalorder 1, %s23
      %p326 = scmp.lt.s32.totalorder %s23, 3
      %p327 = pnand %p325, %p326
      %p328 = pneg %p327
      // Predicated region
      $region53: #{tpu_custom_call.1} parent=5 // pred_check
        _
      $region54: #{tpu_custom_call.1} parent=5 // pred_check_branch
        %330 = sbr.rel (%p327) target = $region56
      $region55: #{tpu_custom_call.1} parent=5 // pred_region
        %s331 = ssub.s32 %s23, 1
        %s332 = sand.u32 %s50, 1
        %s333 = scalar_lea.sflag [#allocation4], %s332
        %s334 = sand.u32 %s50, 1
        %s335 = smul.addr %s334, 256
        %s336 = scalar_lea.vmem [#allocation3], %s335
        // Predicated region
        $region57: #{tpu_custom_call.1} parent=55 // pred_check
          %p337 = pneg %p63
        $region58: #{tpu_custom_call.1} parent=55 // pred_check_branch
          %339 = sbr.rel (%p337) target = $region60
        $region59: #{tpu_custom_call.1} parent=55 // pred_region
          %340 = dma.done %s333, 4096
        $region60: #{tpu_custom_call.1} parent=55 // pred_fallthru
          _
        %s341 = sand.u32 %s50, 1
        %s342 = scalar_lea.sflag [#allocation4], %s341
        %s343 = sand.u32 %s50, 1
        %s344 = smul.addr %s343, 256
        %s345 = scalar_lea.vmem [#allocation3], %s344
        %p346 = pneg %p63
        %p347 = pneg %p60
        %p348 = pneg %p84
        %p349 = pneg %p81
        %p350 = pneg %p105
        %p351 = pneg %p102
        %p352 = pneg %p126
        %p353 = pneg %p123
        %p354 = pneg %p147
        %p355 = pneg %p144
        %p356 = pneg %p168
        %p357 = pneg %p165
        %p358 = pneg %p189
        %p359 = pneg %p186
        %p360 = pneg %p210
        %p361 = pneg %p207
        %p362 = pneg %p231
        %p363 = pneg %p228
        %p364 = pneg %p259
        %p365 = pneg %p256
        %s366 = sand.u32 %s246, 1
        %s367 = scalar_lea.sflag [#allocation5], %s366
        %s368 = sand.u32 %s246, 1
        %s369 = smul.addr %s368, 8
        %s370 = scalar_lea.vmem [#allocation6], %s369
        %s371 = smul.u32 8, %s33
        %s372 = smul.u32 8, %s33
        %v374 = vld [vmem:[%s1] sm:$0xf]
        %v375 = vld [vmem:[%s1 + $0x4] sm:$0xf]
        %v376 = vld [vmem:[%s1 + $0x8] sm:$0xf]
        %v377 = vld [vmem:[%s1 + $0xc] sm:$0xf]
        %v378 = vld [vmem:[%s1 + $0x10] sm:$0xf]
        %v379 = vld [vmem:[%s1 + $0x14] sm:$0xf]
        %v380 = vld [vmem:[%s1 + $0x18] sm:$0xf]
        %v381 = vld [vmem:[%s1 + $0x1c] sm:$0xf]
        %v382 = vld [vmem:[%s3] sm:$0xf]
        %v383 = vld [vmem:[%s3 + $0x4] sm:$0xf]
        %v384 = vld [vmem:[%s3 + $0x8] sm:$0xf]
        %v385 = vld [vmem:[%s3 + $0xc] sm:$0xf]
        %v386 = vld [vmem:[%s5] sm:$0xf]
        %v387 = vld [vmem:[%s5 + $0x4] sm:$0xf]
        %v388 = vld [vmem:[%s7] sm:$0xff]
        %v389 = vld [vmem:[%s7 + $0x8] sm:$0xff]
        %v390 = vld [vmem:[%s2] sm:$0xff]
        %v391 = vld [vmem:[%s2 + $0x8] sm:$0xff]
        %v392 = vld [vmem:[%s2 + $0x10] sm:$0xff]
        %v393 = vld [vmem:[%s2 + $0x18] sm:$0xff]
        %v394 = vld [vmem:[%s2 + $0x20] sm:$0xff]
        %v395 = vld [vmem:[%s2 + $0x28] sm:$0xff]
        %v396 = vld [vmem:[%s2 + $0x30] sm:$0xff]
        %v397 = vld [vmem:[%s2 + $0x38] sm:$0xff]
        %v398 = vld [vmem:[%s4] sm:$0xff]
        %v399 = vld [vmem:[%s4 + $0x8] sm:$0xff]
        %v400 = vld [vmem:[%s4 + $0x10] sm:$0xff]
        %v401 = vld [vmem:[%s4 + $0x18] sm:$0xff]
        %v402 = vld [vmem:[%s6] sm:$0xff]
        %v403 = vld [vmem:[%s6 + $0x8] sm:$0xff]
        %v404 = vld [vmem:[#allocation2] sm:$0x1]
        %v405 = vld [vmem:[%s336] sm:$0xff]
        %v406 = vld [vmem:[%s336 + $0x8] sm:$0xff]
        %v407 = vld [vmem:[%s336 + $0x10] sm:$0xff]
        %v408 = vld [vmem:[%s336 + $0x18] sm:$0xff]
        %v409 = vld [vmem:[%s336 + $0x40] sm:$0xff]
        %v410 = vld [vmem:[%s336 + $0x48] sm:$0xff]
        %v411 = vld [vmem:[%s336 + $0x50] sm:$0xff]
        %v412 = vld [vmem:[%s336 + $0x58] sm:$0xff]
        %v413 = vld [vmem:[%s336 + $0x80] sm:$0xff]
        %v414 = vld [vmem:[%s336 + $0x88] sm:$0xff]
        %v415 = vld [vmem:[%s336 + $0x90] sm:$0xff]
        %v416 = vld [vmem:[%s336 + $0x98] sm:$0xff]
        %v417 = vld [vmem:[%s336 + $0xc0] sm:$0xff]
        %v418 = vld [vmem:[%s336 + $0xc8] sm:$0xff]
        %v419 = vld [vmem:[%s336 + $0xd0] sm:$0xff]
        %v420 = vld [vmem:[%s336 + $0xd8] sm:$0xff]
        %v421 = vpack.c.bf16 %v409, %v405
        %v422 = vpack.c.bf16 %v410, %v406
        %v423 = vpack.c.bf16 %v411, %v407
        %v424 = vpack.c.bf16 %v412, %v408
        %v425 = vpack.c.bf16 %v417, %v413
        %v426 = vpack.c.bf16 %v418, %v414
        %v427 = vpack.c.bf16 %v419, %v415
        %v428 = vpack.c.bf16 %v420, %v416
        %430 = vset.pattern.permute.xlu0 0
        %431 = vperm.xlu0 %430, %v390
        %v432 = vpop.permute.xlu0 %431
        %435 = vset.pattern.permute.xlu0 0
        %436 = vperm.xlu0 %435, %v391
        %v437 = vpop.permute.xlu0 %436
        %440 = vset.pattern.permute.xlu0 0
        %441 = vperm.xlu0 %440, %v392
        %v442 = vpop.permute.xlu0 %441
        %445 = vset.pattern.permute.xlu0 0
        %446 = vperm.xlu0 %445, %v393
        %v447 = vpop.permute.xlu0 %446
        %450 = vset.pattern.permute.xlu0 0
        %451 = vperm.xlu0 %450, %v394
        %v452 = vpop.permute.xlu0 %451
        %455 = vset.pattern.permute.xlu0 0
        %456 = vperm.xlu0 %455, %v395
        %v457 = vpop.permute.xlu0 %456
        %460 = vset.pattern.permute.xlu0 0
        %461 = vperm.xlu0 %460, %v396
        %v462 = vpop.permute.xlu0 %461
        %465 = vset.pattern.permute.xlu0 0
        %466 = vperm.xlu0 %465, %v397
        %v467 = vpop.permute.xlu0 %466
        %v477 = vunpack.c.l.b16 %v374
        %v478 = vunpack.c.l.b16 %v375
        %v479 = vunpack.c.l.b16 %v376
        %v480 = vunpack.c.l.b16 %v377
        %v481 = vunpack.c.l.b16 %v378
        %v482 = vunpack.c.l.b16 %v379
        %v483 = vunpack.c.l.b16 %v380
        %v484 = vunpack.c.l.b16 %v381
        %v485 = vpack.c.b16 %v478, %v477
        %v486 = vpack.c.b16 %v480, %v479
        %v487 = vpack.c.b16 %v482, %v481
        %v488 = vpack.c.b16 %v484, %v483
        %vm489 = vcmask 261120
        %v491 = vsel %vm489, %v485, 0
        %v494 = vsel %vm489, %v486, 0
        %v497 = vsel %vm489, %v487, 0
        %v500 = vsel %vm489, %v488, 0
        %502 = vmatprep.subr.bf16.mxu0 0
        %503 = vmatpush1.bf16.msra.mxu0 0
        %504 = vmatprep.subr.bf16.mxu0 0
        %505 = vmatpush1.bf16.msra.mxu0 0
        %506 = vmatprep.subr.bf16.mxu0 0
        %507 = vmatpush1.bf16.msra.mxu0 0
        %508 = vmatprep.subr.bf16.mxu0 0
        %509 = vmatpush1.bf16.msra.mxu0 0
        %510 = vmatprep.subr.bf16.mxu0 0
        %511 = vmatpush1.bf16.msra.mxu0 0
        %512 = vmatprep.subr.bf16.mxu0 0
        %513 = vmatpush1.bf16.msra.mxu0 0
        %514 = vmatprep.subr.bf16.mxu0 %v426
        %515 = vmatpush1.bf16.msra.mxu0 %v425
        %516 = vmatprep.subr.bf16.mxu0 %v422
        %517 = vmatpush1.bf16.msra.mxu0 %v421
        %518 = vmatprep.subr.bf16.mxu0 0
        %519 = vmatpush2.bf16.msra.mxu0 0
        %520 = vmatprep.subr.bf16.mxu0 0
        %521 = vmatpush2.bf16.msra.mxu0 0
        %522 = vmatprep.subr.bf16.mxu0 0
        %523 = vmatpush2.bf16.msra.mxu0 0
        %524 = vmatprep.subr.bf16.mxu0 0
        %525 = vmatpush2.bf16.msra.mxu0 0
        %526 = vmatprep.subr.bf16.mxu0 0
        %527 = vmatpush2.bf16.msra.mxu0 0
        %528 = vmatprep.subr.bf16.mxu0 0
        %529 = vmatpush2.bf16.msra.mxu0 0
        %530 = vmatprep.subr.bf16.mxu0 0
        %531 = vmatpush2.bf16.msra.mxu0 0
        %532 = vmatprep.subr.bf16.mxu0 0
        %533 = vmatpush2.bf16.msra.mxu0 0
        %534 = vmatprep.mubr.bf16.mxu0 0
        %535 = vmatmul.mubr.bf16.gmra.mxu0 %v491
        %v536 = vpop.f32.mrf.mxu0
        %v537 = vadd.f32 %v432, %v536
        %v538 = vpop.f32.mrf.mxu0
        %v539 = vadd.f32 %v432, %v538
        %v540 = vpop.f32.mrf.mxu0
        %v541 = vadd.f32 %v437, %v540
        %v542 = vpop.f32.mrf.mxu0
        %v543 = vadd.f32 %v437, %v542
        %544 = vmatprep.mubr.bf16.mxu0 0
        %545 = vmatmul.mubr.bf16.gmra.mxu0 %v494
        %v546 = vpop.f32.mrf.mxu0
        %v547 = vadd.f32 %v442, %v546
        %v548 = vpop.f32.mrf.mxu0
        %v549 = vadd.f32 %v442, %v548
        %v550 = vpop.f32.mrf.mxu0
        %v551 = vadd.f32 %v447, %v550
        %v552 = vpop.f32.mrf.mxu0
        %v553 = vadd.f32 %v447, %v552
        %554 = vmatprep.mubr.bf16.mxu0 0
        %555 = vmatmul.mubr.bf16.gmra.mxu0 %v497
        %v556 = vpop.f32.mrf.mxu0
        %v557 = vadd.f32 %v452, %v556
        %v558 = vpop.f32.mrf.mxu0
        %v559 = vadd.f32 %v452, %v558
        %v560 = vpop.f32.mrf.mxu0
        %v561 = vadd.f32 %v457, %v560
        %v562 = vpop.f32.mrf.mxu0
        %v563 = vadd.f32 %v457, %v562
        %564 = vmatprep.mubr.bf16.mxu0 0
        %565 = vmatmul.mubr.bf16.gmra.mxu0 %v500
        %v566 = vpop.f32.mrf.mxu0
        %v567 = vadd.f32 %v462, %v566
        %v568 = vpop.f32.mrf.mxu0
        %v569 = vadd.f32 %v462, %v568
        %v570 = vpop.f32.mrf.mxu0
        %v571 = vadd.f32 %v467, %v570
        %v572 = vpop.f32.mrf.mxu0
        %v573 = vadd.f32 %v467, %v572
        %574 = vdwg.mxu0
        %575 = vmatprep.subr.bf16.mxu0 0
        %576 = vmatpush1.bf16.msra.mxu0 0
        %577 = vmatprep.subr.bf16.mxu0 0
        %578 = vmatpush1.bf16.msra.mxu0 0
        %579 = vmatprep.subr.bf16.mxu0 0
        %580 = vmatpush1.bf16.msra.mxu0 0
        %581 = vmatprep.subr.bf16.mxu0 0
        %582 = vmatpush1.bf16.msra.mxu0 0
        %583 = vmatprep.subr.bf16.mxu0 0
        %584 = vmatpush1.bf16.msra.mxu0 0
        %585 = vmatprep.subr.bf16.mxu0 0
        %586 = vmatpush1.bf16.msra.mxu0 0
        %587 = vmatprep.subr.bf16.mxu0 %v428
        %588 = vmatpush1.bf16.msra.mxu0 %v427
        %589 = vmatprep.subr.bf16.mxu0 %v424
        %590 = vmatpush1.bf16.msra.mxu0 %v423
        %591 = vmatprep.subr.bf16.mxu0 0
        %592 = vmatpush2.bf16.msra.mxu0 0
        %593 = vmatprep.subr.bf16.mxu0 0
        %594 = vmatpush2.bf16.msra.mxu0 0
        %595 = vmatprep.subr.bf16.mxu0 0
        %596 = vmatpush2.bf16.msra.mxu0 0
        %597 = vmatprep.subr.bf16.mxu0 0
        %598 = vmatpush2.bf16.msra.mxu0 0
        %599 = vmatprep.subr.bf16.mxu0 0
        %600 = vmatpush2.bf16.msra.mxu0 0
        %601 = vmatprep.subr.bf16.mxu0 0
        %602 = vmatpush2.bf16.msra.mxu0 0
        %603 = vmatprep.subr.bf16.mxu0 0
        %604 = vmatpush2.bf16.msra.mxu0 0
        %605 = vmatprep.subr.bf16.mxu0 0
        %606 = vmatpush2.bf16.msra.mxu0 0
        %607 = vmatprep.mubr.bf16.mxu0 0
        %608 = vmatmul.mubr.bf16.gmra.mxu0 %v491
        %v609 = vpop.f32.mrf.mxu0
        %v610 = vadd.f32 %v432, %v609
        %v611 = vpop.f32.mrf.mxu0
        %v612 = vadd.f32 %v432, %v611
        %v613 = vpop.f32.mrf.mxu0
        %v614 = vadd.f32 %v437, %v613
        %v615 = vpop.f32.mrf.mxu0
        %v616 = vadd.f32 %v437, %v615
        %617 = vmatprep.mubr.bf16.mxu0 0
        %618 = vmatmul.mubr.bf16.gmra.mxu0 %v494
        %v619 = vpop.f32.mrf.mxu0
        %v620 = vadd.f32 %v442, %v619
        %v621 = vpop.f32.mrf.mxu0
        %v622 = vadd.f32 %v442, %v621
        %v623 = vpop.f32.mrf.mxu0
        %v624 = vadd.f32 %v447, %v623
        %v625 = vpop.f32.mrf.mxu0
        %v626 = vadd.f32 %v447, %v625
        %627 = vmatprep.mubr.bf16.mxu0 0
        %628 = vmatmul.mubr.bf16.gmra.mxu0 %v497
        %v629 = vpop.f32.mrf.mxu0
        %v630 = vadd.f32 %v452, %v629
        %v631 = vpop.f32.mrf.mxu0
        %v632 = vadd.f32 %v452, %v631
        %v633 = vpop.f32.mrf.mxu0
        %v634 = vadd.f32 %v457, %v633
        %v635 = vpop.f32.mrf.mxu0
        %v636 = vadd.f32 %v457, %v635
        %637 = vmatprep.mubr.bf16.mxu0 0
        %638 = vmatmul.mubr.bf16.gmra.mxu0 %v500
        %v639 = vpop.f32.mrf.mxu0
        %v640 = vadd.f32 %v462, %v639
        %v641 = vpop.f32.mrf.mxu0
        %v642 = vadd.f32 %v462, %v641
        %v643 = vpop.f32.mrf.mxu0
        %v644 = vadd.f32 %v467, %v643
        %v645 = vpop.f32.mrf.mxu0
        %v646 = vadd.f32 %v467, %v645
        %647 = vdwg.mxu0
        %vm648 = vcmp.gt.f32.partialorder %v537, 0.0
        %vm649 = vcmp.gt.f32.partialorder %v539, 0.0
        %vm650 = vcmp.gt.f32.partialorder %v610, 0.0
        %vm651 = vcmp.gt.f32.partialorder %v612, 0.0
        %vm652 = vcmp.gt.f32.partialorder %v541, 0.0
        %vm653 = vcmp.gt.f32.partialorder %v543, 0.0
        %vm654 = vcmp.gt.f32.partialorder %v614, 0.0
        %vm655 = vcmp.gt.f32.partialorder %v616, 0.0
        %vm656 = vcmp.gt.f32.partialorder %v547, 0.0
        %vm657 = vcmp.gt.f32.partialorder %v549, 0.0
        %vm658 = vcmp.gt.f32.partialorder %v620, 0.0
        %vm659 = vcmp.gt.f32.partialorder %v622, 0.0
        %vm660 = vcmp.gt.f32.partialorder %v551, 0.0
        %vm661 = vcmp.gt.f32.partialorder %v553, 0.0
        %vm662 = vcmp.gt.f32.partialorder %v624, 0.0
        %vm663 = vcmp.gt.f32.partialorder %v626, 0.0
        %vm664 = vcmp.gt.f32.partialorder %v557, 0.0
        %vm665 = vcmp.gt.f32.partialorder %v559, 0.0
        %vm666 = vcmp.gt.f32.partialorder %v630, 0.0
        %vm667 = vcmp.gt.f32.partialorder %v632, 0.0
        %vm668 = vcmp.gt.f32.partialorder %v561, 0.0
        %vm669 = vcmp.gt.f32.partialorder %v563, 0.0
        %vm670 = vcmp.gt.f32.partialorder %v634, 0.0
        %vm671 = vcmp.gt.f32.partialorder %v636, 0.0
        %vm672 = vcmp.gt.f32.partialorder %v567, 0.0
        %vm673 = vcmp.gt.f32.partialorder %v569, 0.0
        %vm674 = vcmp.gt.f32.partialorder %v640, 0.0
        %vm675 = vcmp.gt.f32.partialorder %v642, 0.0
        %vm676 = vcmp.gt.f32.partialorder %v571, 0.0
        %vm677 = vcmp.gt.f32.partialorder %v573, 0.0
        %vm678 = vcmp.gt.f32.partialorder %v644, 0.0
        %vm679 = vcmp.gt.f32.partialorder %v646, 0.0
        %v680 = vmul.f32 %v537, 0.01
        %v681 = vmul.f32 %v539, 0.01
        %v682 = vmul.f32 %v610, 0.01
        %v683 = vmul.f32 %v612, 0.01
        %v684 = vmul.f32 %v541, 0.01
        %v685 = vmul.f32 %v543, 0.01
        %v686 = vmul.f32 %v614, 0.01
        %v687 = vmul.f32 %v616, 0.01
        %v688 = vmul.f32 %v547, 0.01
        %v689 = vmul.f32 %v549, 0.01
        %v690 = vmul.f32 %v620, 0.01
        %v691 = vmul.f32 %v622, 0.01
        %v692 = vmul.f32 %v551, 0.01
        %v693 = vmul.f32 %v553, 0.01
        %v694 = vmul.f32 %v624, 0.01
        %v695 = vmul.f32 %v626, 0.01
        %v696 = vmul.f32 %v557, 0.01
        %v697 = vmul.f32 %v559, 0.01
        %v698 = vmul.f32 %v630, 0.01
        %v699 = vmul.f32 %v632, 0.01
        %v700 = vmul.f32 %v561, 0.01
        %v701 = vmul.f32 %v563, 0.01
        %v702 = vmul.f32 %v634, 0.01
        %v703 = vmul.f32 %v636, 0.01
        %v704 = vmul.f32 %v567, 0.01
        %v705 = vmul.f32 %v569, 0.01
        %v706 = vmul.f32 %v640, 0.01
        %v707 = vmul.f32 %v642, 0.01
        %v708 = vmul.f32 %v571, 0.01
        %v709 = vmul.f32 %v573, 0.01
        %v710 = vmul.f32 %v644, 0.01
        %v711 = vmul.f32 %v646, 0.01
        %v712 = vsel %vm648, %v537, %v680
        %v713 = vsel %vm649, %v539, %v681
        %v714 = vsel %vm650, %v610, %v682
        %v715 = vsel %vm651, %v612, %v683
        %v716 = vsel %vm652, %v541, %v684
        %v717 = vsel %vm653, %v543, %v685
        %v718 = vsel %vm654, %v614, %v686
        %v719 = vsel %vm655, %v616, %v687
        %v720 = vsel %vm656, %v547, %v688
        %v721 = vsel %vm657, %v549, %v689
        %v722 = vsel %vm658, %v620, %v690
        %v723 = vsel %vm659, %v622, %v691
        %v724 = vsel %vm660, %v551, %v692
        %v725 = vsel %vm661, %v553, %v693
        %v726 = vsel %vm662, %v624, %v694
        %v727 = vsel %vm663, %v626, %v695
        %v728 = vsel %vm664, %v557, %v696
        %v729 = vsel %vm665, %v559, %v697
        %v730 = vsel %vm666, %v630, %v698
        %v731 = vsel %vm667, %v632, %v699
        %v732 = vsel %vm668, %v561, %v700
        %v733 = vsel %vm669, %v563, %v701
        %v734 = vsel %vm670, %v634, %v702
        %v735 = vsel %vm671, %v636, %v703
        %v736 = vsel %vm672, %v567, %v704
        %v737 = vsel %vm673, %v569, %v705
        %v738 = vsel %vm674, %v640, %v706
        %v739 = vsel %vm675, %v642, %v707
        %v740 = vsel %vm676, %v571, %v708
        %v741 = vsel %vm677, %v573, %v709
        %v742 = vsel %vm678, %v644, %v710
        %v743 = vsel %vm679, %v646, %v711
        %v744 = vpack.c.bf16 %v716, %v712
        %v745 = vpack.c.bf16 %v717, %v713
        %v746 = vpack.c.bf16 %v718, %v714
        %v747 = vpack.c.bf16 %v719, %v715
        %v748 = vpack.c.bf16 %v724, %v720
        %v749 = vpack.c.bf16 %v725, %v721
        %v750 = vpack.c.bf16 %v726, %v722
        %v751 = vpack.c.bf16 %v727, %v723
        %v752 = vpack.c.bf16 %v732, %v728
        %v753 = vpack.c.bf16 %v733, %v729
        %v754 = vpack.c.bf16 %v734, %v730
        %v755 = vpack.c.bf16 %v735, %v731
        %v756 = vpack.c.bf16 %v740, %v736
        %v757 = vpack.c.bf16 %v741, %v737
        %v758 = vpack.c.bf16 %v742, %v738
        %v759 = vpack.c.bf16 %v743, %v739
        %761 = vset.pattern.permute.xlu0 0
        %762 = vperm.xlu0 %761, %v398
        %v763 = vpop.permute.xlu0 %762
        %766 = vset.pattern.permute.xlu0 0
        %767 = vperm.xlu0 %766, %v399
        %v768 = vpop.permute.xlu0 %767
        %771 = vset.pattern.permute.xlu0 0
        %772 = vperm.xlu0 %771, %v400
        %v773 = vpop.permute.xlu0 %772
        %776 = vset.pattern.permute.xlu0 0
        %777 = vperm.xlu0 %776, %v401
        %v778 = vpop.permute.xlu0 %777
        %v784 = vunpack.c.l.b16 %v382
        %v785 = vunpack.c.l.b16 %v383
        %v786 = vunpack.c.l.b16 %v384
        %v787 = vunpack.c.l.b16 %v385
        %v788 = vpack.c.b16 %v785, %v784
        %v789 = vpack.c.b16 %v787, %v786
        %vm790 = vcmask 523264
        %v792 = vsel %vm790, %v788, 0
        %v795 = vsel %vm790, %v789, 0
        %797 = vmatprep.subr.bf16.mxu0 0
        %798 = vmatpush1.bf16.msra.mxu0 0
        %799 = vmatprep.subr.bf16.mxu0 0
        %800 = vmatpush1.bf16.msra.mxu0 0
        %801 = vmatprep.subr.bf16.mxu0 0
        %802 = vmatpush1.bf16.msra.mxu0 0
        %803 = vmatprep.subr.bf16.mxu0 0
        %804 = vmatpush1.bf16.msra.mxu0 0
        %805 = vmatprep.subr.bf16.mxu0 %v757
        %806 = vmatpush1.bf16.msra.mxu0 %v756
        %807 = vmatprep.subr.bf16.mxu0 %v753
        %808 = vmatpush1.bf16.msra.mxu0 %v752
        %809 = vmatprep.subr.bf16.mxu0 %v749
        %810 = vmatpush1.bf16.msra.mxu0 %v748
        %811 = vmatprep.subr.bf16.mxu0 %v745
        %812 = vmatpush1.bf16.msra.mxu0 %v744
        %813 = vmatprep.subr.bf16.mxu0 0
        %814 = vmatpush2.bf16.msra.mxu0 0
        %815 = vmatprep.subr.bf16.mxu0 0
        %816 = vmatpush2.bf16.msra.mxu0 0
        %817 = vmatprep.subr.bf16.mxu0 0
        %818 = vmatpush2.bf16.msra.mxu0 0
        %819 = vmatprep.subr.bf16.mxu0 0
        %820 = vmatpush2.bf16.msra.mxu0 0
        %821 = vmatprep.subr.bf16.mxu0 0
        %822 = vmatpush2.bf16.msra.mxu0 0
        %823 = vmatprep.subr.bf16.mxu0 0
        %824 = vmatpush2.bf16.msra.mxu0 0
        %825 = vmatprep.subr.bf16.mxu0 0
        %826 = vmatpush2.bf16.msra.mxu0 0
        %827 = vmatprep.subr.bf16.mxu0 0
        %828 = vmatpush2.bf16.msra.mxu0 0
        %829 = vmatprep.mubr.bf16.mxu0 0
        %830 = vmatmul.mubr.bf16.gmra.mxu0 %v792
        %v831 = vpop.f32.mrf.mxu0
        %v832 = vadd.f32 %v763, %v831
        %v833 = vpop.f32.mrf.mxu0
        %v834 = vadd.f32 %v763, %v833
        %v835 = vpop.f32.mrf.mxu0
        %v836 = vadd.f32 %v768, %v835
        %v837 = vpop.f32.mrf.mxu0
        %v838 = vadd.f32 %v768, %v837
        %839 = vmatprep.mubr.bf16.mxu0 0
        %840 = vmatmul.mubr.bf16.gmra.mxu0 %v795
        %v841 = vpop.f32.mrf.mxu0
        %v842 = vadd.f32 %v773, %v841
        %v843 = vpop.f32.mrf.mxu0
        %v844 = vadd.f32 %v773, %v843
        %v845 = vpop.f32.mrf.mxu0
        %v846 = vadd.f32 %v778, %v845
        %v847 = vpop.f32.mrf.mxu0
        %v848 = vadd.f32 %v778, %v847
        %849 = vdwg.mxu0
        %850 = vmatprep.subr.bf16.mxu0 0
        %851 = vmatpush1.bf16.msra.mxu0 0
        %852 = vmatprep.subr.bf16.mxu0 0
        %853 = vmatpush1.bf16.msra.mxu0 0
        %854 = vmatprep.subr.bf16.mxu0 0
        %855 = vmatpush1.bf16.msra.mxu0 0
        %856 = vmatprep.subr.bf16.mxu0 0
        %857 = vmatpush1.bf16.msra.mxu0 0
        %858 = vmatprep.subr.bf16.mxu0 %v759
        %859 = vmatpush1.bf16.msra.mxu0 %v758
        %860 = vmatprep.subr.bf16.mxu0 %v755
        %861 = vmatpush1.bf16.msra.mxu0 %v754
        %862 = vmatprep.subr.bf16.mxu0 %v751
        %863 = vmatpush1.bf16.msra.mxu0 %v750
        %864 = vmatprep.subr.bf16.mxu0 %v747
        %865 = vmatpush1.bf16.msra.mxu0 %v746
        %866 = vmatprep.subr.bf16.mxu0 0
        %867 = vmatpush2.bf16.msra.mxu0 0
        %868 = vmatprep.subr.bf16.mxu0 0
        %869 = vmatpush2.bf16.msra.mxu0 0
        %870 = vmatprep.subr.bf16.mxu0 0
        %871 = vmatpush2.bf16.msra.mxu0 0
        %872 = vmatprep.subr.bf16.mxu0 0
        %873 = vmatpush2.bf16.msra.mxu0 0
        %874 = vmatprep.subr.bf16.mxu0 0
        %875 = vmatpush2.bf16.msra.mxu0 0
        %876 = vmatprep.subr.bf16.mxu0 0
        %877 = vmatpush2.bf16.msra.mxu0 0
        %878 = vmatprep.subr.bf16.mxu0 0
        %879 = vmatpush2.bf16.msra.mxu0 0
        %880 = vmatprep.subr.bf16.mxu0 0
        %881 = vmatpush2.bf16.msra.mxu0 0
        %882 = vmatprep.mubr.bf16.mxu0 0
        %883 = vmatmul.mubr.bf16.gmra.mxu0 %v792
        %v884 = vpop.f32.mrf.mxu0
        %v885 = vadd.f32 %v763, %v884
        %v886 = vpop.f32.mrf.mxu0
        %v887 = vadd.f32 %v763, %v886
        %v888 = vpop.f32.mrf.mxu0
        %v889 = vadd.f32 %v768, %v888
        %v890 = vpop.f32.mrf.mxu0
        %v891 = vadd.f32 %v768, %v890
        %892 = vmatprep.mubr.bf16.mxu0 0
        %893 = vmatmul.mubr.bf16.gmra.mxu0 %v795
        %v894 = vpop.f32.mrf.mxu0
        %v895 = vadd.f32 %v773, %v894
        %v896 = vpop.f32.mrf.mxu0
        %v897 = vadd.f32 %v773, %v896
        %v898 = vpop.f32.mrf.mxu0
        %v899 = vadd.f32 %v778, %v898
        %v900 = vpop.f32.mrf.mxu0
        %v901 = vadd.f32 %v778, %v900
        %902 = vdwg.mxu0
        %vm903 = vcmp.gt.f32.partialorder %v832, 0.0
        %vm904 = vcmp.gt.f32.partialorder %v834, 0.0
        %vm905 = vcmp.gt.f32.partialorder %v885, 0.0
        %vm906 = vcmp.gt.f32.partialorder %v887, 0.0
        %vm907 = vcmp.gt.f32.partialorder %v836, 0.0
        %vm908 = vcmp.gt.f32.partialorder %v838, 0.0
        %vm909 = vcmp.gt.f32.partialorder %v889, 0.0
        %vm910 = vcmp.gt.f32.partialorder %v891, 0.0
        %vm911 = vcmp.gt.f32.partialorder %v842, 0.0
        %vm912 = vcmp.gt.f32.partialorder %v844, 0.0
        %vm913 = vcmp.gt.f32.partialorder %v895, 0.0
        %vm914 = vcmp.gt.f32.partialorder %v897, 0.0
        %vm915 = vcmp.gt.f32.partialorder %v846, 0.0
        %vm916 = vcmp.gt.f32.partialorder %v848, 0.0
        %vm917 = vcmp.gt.f32.partialorder %v899, 0.0
        %vm918 = vcmp.gt.f32.partialorder %v901, 0.0
        %v919 = vmul.f32 %v832, 0.01
        %v920 = vmul.f32 %v834, 0.01
        %v921 = vmul.f32 %v885, 0.01
        %v922 = vmul.f32 %v887, 0.01
        %v923 = vmul.f32 %v836, 0.01
        %v924 = vmul.f32 %v838, 0.01
        %v925 = vmul.f32 %v889, 0.01
        %v926 = vmul.f32 %v891, 0.01
        %v927 = vmul.f32 %v842, 0.01
        %v928 = vmul.f32 %v844, 0.01
        %v929 = vmul.f32 %v895, 0.01
        %v930 = vmul.f32 %v897, 0.01
        %v931 = vmul.f32 %v846, 0.01
        %v932 = vmul.f32 %v848, 0.01
        %v933 = vmul.f32 %v899, 0.01
        %v934 = vmul.f32 %v901, 0.01
        %v935 = vsel %vm903, %v832, %v919
        %v936 = vsel %vm904, %v834, %v920
        %v937 = vsel %vm905, %v885, %v921
        %v938 = vsel %vm906, %v887, %v922
        %v939 = vsel %vm907, %v836, %v923
        %v940 = vsel %vm908, %v838, %v924
        %v941 = vsel %vm909, %v889, %v925
        %v942 = vsel %vm910, %v891, %v926
        %v943 = vsel %vm911, %v842, %v927
        %v944 = vsel %vm912, %v844, %v928
        %v945 = vsel %vm913, %v895, %v929
        %v946 = vsel %vm914, %v897, %v930
        %v947 = vsel %vm915, %v846, %v931
        %v948 = vsel %vm916, %v848, %v932
        %v949 = vsel %vm917, %v899, %v933
        %v950 = vsel %vm918, %v901, %v934
        %v951 = vpack.c.bf16 %v939, %v935
        %v952 = vpack.c.bf16 %v940, %v936
        %v953 = vpack.c.bf16 %v941, %v937
        %v954 = vpack.c.bf16 %v942, %v938
        %v955 = vpack.c.bf16 %v947, %v943
        %v956 = vpack.c.bf16 %v948, %v944
        %v957 = vpack.c.bf16 %v949, %v945
        %v958 = vpack.c.bf16 %v950, %v946
        %960 = vset.pattern.permute.xlu0 0
        %961 = vperm.xlu0 %960, %v402
        %v962 = vpop.permute.xlu0 %961
        %965 = vset.pattern.permute.xlu0 0
        %966 = vperm.xlu0 %965, %v403
        %v967 = vpop.permute.xlu0 %966
        %v971 = vunpack.c.l.b16 %v386
        %v972 = vunpack.c.l.b16 %v387
        %v973 = vpack.c.b16 %v972, %v971
        %v975 = vsel %vm489, %v973, 0
        %977 = vmatprep.subr.bf16.mxu0 0
        %978 = vmatpush1.bf16.msra.mxu0 0
        %979 = vmatprep.subr.bf16.mxu0 0
        %980 = vmatpush1.bf16.msra.mxu0 0
        %981 = vmatprep.subr.bf16.mxu0 0
        %982 = vmatpush1.bf16.msra.mxu0 0
        %983 = vmatprep.subr.bf16.mxu0 0
        %984 = vmatpush1.bf16.msra.mxu0 0
        %985 = vmatprep.subr.bf16.mxu0 0
        %986 = vmatpush1.bf16.msra.mxu0 0
        %987 = vmatprep.subr.bf16.mxu0 0
        %988 = vmatpush1.bf16.msra.mxu0 0
        %989 = vmatprep.subr.bf16.mxu0 %v956
        %990 = vmatpush1.bf16.msra.mxu0 %v955
        %991 = vmatprep.subr.bf16.mxu0 %v952
        %992 = vmatpush1.bf16.msra.mxu0 %v951
        %993 = vmatprep.subr.bf16.mxu0 0
        %994 = vmatpush2.bf16.msra.mxu0 0
        %995 = vmatprep.subr.bf16.mxu0 0
        %996 = vmatpush2.bf16.msra.mxu0 0
        %997 = vmatprep.subr.bf16.mxu0 0
        %998 = vmatpush2.bf16.msra.mxu0 0
        %999 = vmatprep.subr.bf16.mxu0 0
        %1000 = vmatpush2.bf16.msra.mxu0 0
        %1001 = vmatprep.subr.bf16.mxu0 0
        %1002 = vmatpush2.bf16.msra.mxu0 0
        %1003 = vmatprep.subr.bf16.mxu0 0
        %1004 = vmatpush2.bf16.msra.mxu0 0
        %1005 = vmatprep.subr.bf16.mxu0 0
        %1006 = vmatpush2.bf16.msra.mxu0 0
        %1007 = vmatprep.subr.bf16.mxu0 0
        %1008 = vmatpush2.bf16.msra.mxu0 0
        %1009 = vmatprep.mubr.bf16.mxu0 0
        %1010 = vmatmul.mubr.bf16.gmra.mxu0 %v975
        %v1011 = vpop.f32.mrf.mxu0
        %v1012 = vadd.f32 %v962, %v1011
        %v1013 = vpop.f32.mrf.mxu0
        %v1014 = vadd.f32 %v962, %v1013
        %v1015 = vpop.f32.mrf.mxu0
        %v1016 = vadd.f32 %v967, %v1015
        %v1017 = vpop.f32.mrf.mxu0
        %v1018 = vadd.f32 %v967, %v1017
        %1019 = vdwg.mxu0
        %1020 = vmatprep.subr.bf16.mxu0 0
        %1021 = vmatpush1.bf16.msra.mxu0 0
        %1022 = vmatprep.subr.bf16.mxu0 0
        %1023 = vmatpush1.bf16.msra.mxu0 0
        %1024 = vmatprep.subr.bf16.mxu0 0
        %1025 = vmatpush1.bf16.msra.mxu0 0
        %1026 = vmatprep.subr.bf16.mxu0 0
        %1027 = vmatpush1.bf16.msra.mxu0 0
        %1028 = vmatprep.subr.bf16.mxu0 0
        %1029 = vmatpush1.bf16.msra.mxu0 0
        %1030 = vmatprep.subr.bf16.mxu0 0
        %1031 = vmatpush1.bf16.msra.mxu0 0
        %1032 = vmatprep.subr.bf16.mxu0 %v958
        %1033 = vmatpush1.bf16.msra.mxu0 %v957
        %1034 = vmatprep.subr.bf16.mxu0 %v954
        %1035 = vmatpush1.bf16.msra.mxu0 %v953
        %1036 = vmatprep.subr.bf16.mxu0 0
        %1037 = vmatpush2.bf16.msra.mxu0 0
        %1038 = vmatprep.subr.bf16.mxu0 0
        %1039 = vmatpush2.bf16.msra.mxu0 0
        %1040 = vmatprep.subr.bf16.mxu0 0
        %1041 = vmatpush2.bf16.msra.mxu0 0
        %1042 = vmatprep.subr.bf16.mxu0 0
        %1043 = vmatpush2.bf16.msra.mxu0 0
        %1044 = vmatprep.subr.bf16.mxu0 0
        %1045 = vmatpush2.bf16.msra.mxu0 0
        %1046 = vmatprep.subr.bf16.mxu0 0
        %1047 = vmatpush2.bf16.msra.mxu0 0
        %1048 = vmatprep.subr.bf16.mxu0 0
        %1049 = vmatpush2.bf16.msra.mxu0 0
        %1050 = vmatprep.subr.bf16.mxu0 0
        %1051 = vmatpush2.bf16.msra.mxu0 0
        %1052 = vmatprep.mubr.bf16.mxu0 0
        %1053 = vmatmul.mubr.bf16.gmra.mxu0 %v975
        %v1054 = vpop.f32.mrf.mxu0
        %v1055 = vadd.f32 %v962, %v1054
        %v1056 = vpop.f32.mrf.mxu0
        %v1057 = vadd.f32 %v962, %v1056
        %v1058 = vpop.f32.mrf.mxu0
        %v1059 = vadd.f32 %v967, %v1058
        %v1060 = vpop.f32.mrf.mxu0
        %v1061 = vadd.f32 %v967, %v1060
        %1062 = vdwg.mxu0
        %vm1063 = vcmp.gt.f32.partialorder %v1012, 0.0
        %vm1064 = vcmp.gt.f32.partialorder %v1014, 0.0
        %vm1065 = vcmp.gt.f32.partialorder %v1055, 0.0
        %vm1066 = vcmp.gt.f32.partialorder %v1057, 0.0
        %vm1067 = vcmp.gt.f32.partialorder %v1016, 0.0
        %vm1068 = vcmp.gt.f32.partialorder %v1018, 0.0
        %vm1069 = vcmp.gt.f32.partialorder %v1059, 0.0
        %vm1070 = vcmp.gt.f32.partialorder %v1061, 0.0
        %v1071 = vmul.f32 %v1012, 0.01
        %v1072 = vmul.f32 %v1014, 0.01
        %v1073 = vmul.f32 %v1055, 0.01
        %v1074 = vmul.f32 %v1057, 0.01
        %v1075 = vmul.f32 %v1016, 0.01
        %v1076 = vmul.f32 %v1018, 0.01
        %v1077 = vmul.f32 %v1059, 0.01
        %v1078 = vmul.f32 %v1061, 0.01
        %v1079 = vsel %vm1063, %v1012, %v1071
        %v1080 = vsel %vm1064, %v1014, %v1072
        %v1081 = vsel %vm1065, %v1055, %v1073
        %v1082 = vsel %vm1066, %v1057, %v1074
        %v1083 = vsel %vm1067, %v1016, %v1075
        %v1084 = vsel %vm1068, %v1018, %v1076
        %v1085 = vsel %vm1069, %v1059, %v1077
        %v1086 = vsel %vm1070, %v1061, %v1078
        %1088 = vset.pattern.permute.xlu0 0
        %1089 = vperm.xlu0 %1088, %v388
        %v1090 = vpop.permute.xlu0 %1089
        %1093 = vset.pattern.permute.xlu0 0
        %1094 = vperm.xlu0 %1093, %v389
        %v1095 = vpop.permute.xlu0 %1094
        %v1097 = vmul.f32 %v1090, %v1079
        %v1098 = vmul.f32 %v1090, %v1080
        %v1099 = vmul.f32 %v1090, %v1081
        %v1100 = vmul.f32 %v1090, %v1082
        %v1101 = vmul.f32 %v1095, %v1083
        %v1102 = vmul.f32 %v1095, %v1084
        %v1103 = vmul.f32 %v1095, %v1085
        %v1104 = vmul.f32 %v1095, %v1086
        %v1105 = vadd.f32 %v1097, %v1101
        %v1106 = vrot.slane %v1105, 4
        %v1107 = vadd.f32 %v1105, %v1106
        %v1108 = vrot.slane %v1107, 2
        %v1109 = vadd.f32 %v1107, %v1108
        %v1110 = vrot.slane %v1109, 1
        %v1111 = vadd.f32 %v1109, %v1110
        %v1112 = vadd.f32 %v1098, %v1102
        %v1113 = vrot.slane %v1112, 4
        %v1114 = vadd.f32 %v1112, %v1113
        %v1115 = vrot.slane %v1114, 2
        %v1116 = vadd.f32 %v1114, %v1115
        %v1117 = vrot.slane %v1116, 1
        %v1118 = vadd.f32 %v1116, %v1117
        %v1119 = vadd.f32 %v1099, %v1103
        %v1120 = vrot.slane %v1119, 4
        %v1121 = vadd.f32 %v1119, %v1120
        %v1122 = vrot.slane %v1121, 2
        %v1123 = vadd.f32 %v1121, %v1122
        %v1124 = vrot.slane %v1123, 1
        %v1125 = vadd.f32 %v1123, %v1124
        %v1126 = vadd.f32 %v1100, %v1104
        %v1127 = vrot.slane %v1126, 4
        %v1128 = vadd.f32 %v1126, %v1127
        %v1129 = vrot.slane %v1128, 2
        %v1130 = vadd.f32 %v1128, %v1129
        %v1131 = vrot.slane %v1130, 1
        %v1132 = vadd.f32 %v1130, %v1131
        %1134 = vset.pattern.permute.xlu0 0
        %1135 = vperm.xlu0 %1134, %v404
        %v1136 = vpop.permute.xlu0 %1135
        %v1138 = vlaneseq
        %v1139 = vshrl.u32 %v1138, 7
        %v1140 = vsub.s32 0, %v1139
        %v1141 = vrot.slane %v1136, %v1140
        %v1142 = vadd.f32 %v1111, %v1141
        %v1143 = vadd.f32 %v1118, %v1141
        %v1144 = vadd.f32 %v1125, %v1141
        %v1145 = vadd.f32 %v1132, %v1141
        %v1146 = vxor.u32 %v1142, 2147483648
        %v1147 = vxor.u32 %v1143, 2147483648
        %v1148 = vxor.u32 %v1144, 2147483648
        %v1149 = vxor.u32 %v1145, 2147483648
        %v1150 = vmul.f32 %v1146, 1.442695
        %v1151 = vpow.pop %v1150
        %v1152 = vmul.f32 %v1147, 1.442695
        %v1153 = vpow.pop %v1152
        %v1154 = vmul.f32 %v1148, 1.442695
        %v1155 = vpow.pop %v1154
        %v1156 = vmul.f32 %v1149, 1.442695
        %v1157 = vpow.pop %v1156
        %v1158 = vadd.f32 %v1151, 1.0
        %v1159 = vadd.f32 %v1153, 1.0
        %v1160 = vadd.f32 %v1155, 1.0
        %v1161 = vadd.f32 %v1157, 1.0
        %v1162 = vrcp.pop %v1158
        %v1163 = vmul.f32 1.0, %v1162
        %v1164 = vrcp.pop %v1159
        %v1165 = vmul.f32 1.0, %v1164
        %v1166 = vrcp.pop %v1160
        %v1167 = vmul.f32 1.0, %v1166
        %v1168 = vrcp.pop %v1161
        %v1169 = vmul.f32 1.0, %v1168
        %v1174 = vcombine.low %v1163, %v1165
        %v1175 = vcombine.low %v1167, %v1169
        %v1177 = vunpack.c.l.s4 1966171168
        %v1178 = vunpack.c.0.s8 %v1177
        %v1179 = vlaneseq
        %v1180 = vshrl.u32 %v1179, 7
        %v1181 = vsub.s32 %v1178, %v1180
        %v1182 = vrot.slane %v1174, %v1181
        %v1184 = vunpack.c.l.s4 1966171168
        %v1185 = vunpack.c.0.s8 %v1184
        %v1186 = vlaneseq
        %v1187 = vshrl.u32 %v1186, 7
        %v1188 = vsub.s32 %v1185, %v1187
        %v1189 = vrot.slane %v1175, %v1188
        %v1190 = vcombine.low %v1182, %v1189
        %v1192 = vunpack.c.l.s4 1966171168
        %v1193 = vunpack.c.0.s8 %v1192
        %v1194 = vlaneseq
        %v1195 = vshrl.u32 %v1194, 7
        %v1196 = vsub.s32 %v1193, %v1195
        %v1197 = vrot.slane %v1190, %v1196
        %v1199 = vlaneseq
        %vm1200 = vcmp.ge.s32.totalorder %v1199, 0
        %vm1201 = vcmp.lt.s32.totalorder %v1199, 512
        %vm1202 = vmand %vm1200, %vm1201
        %1203 = vst.msk [vmem:[%s370] sm:$0xf] %vm1202, %v1197
        %s1204 = scalar_lea.vmem %s336, 32 [#allocation3]
        %v1205 = vld [vmem:[%s1204] sm:$0xff]
        %v1206 = vld [vmem:[%s1204 + $0x8] sm:$0xff]
        %v1207 = vld [vmem:[%s1204 + $0x10] sm:$0xff]
        %v1208 = vld [vmem:[%s1204 + $0x18] sm:$0xff]
        %v1209 = vld [vmem:[%s1204 + $0x40] sm:$0xff]
        %v1210 = vld [vmem:[%s1204 + $0x48] sm:$0xff]
        %v1211 = vld [vmem:[%s1204 + $0x50] sm:$0xff]
        %v1212 = vld [vmem:[%s1204 + $0x58] sm:$0xff]
        %v1213 = vld [vmem:[%s1204 + $0x80] sm:$0xff]
        %v1214 = vld [vmem:[%s1204 + $0x88] sm:$0xff]
        %v1215 = vld [vmem:[%s1204 + $0x90] sm:$0xff]
        %v1216 = vld [vmem:[%s1204 + $0x98] sm:$0xff]
        %v1217 = vld [vmem:[%s1204 + $0xc0] sm:$0xff]
        %v1218 = vld [vmem:[%s1204 + $0xc8] sm:$0xff]
        %v1219 = vld [vmem:[%s1204 + $0xd0] sm:$0xff]
        %v1220 = vld [vmem:[%s1204 + $0xd8] sm:$0xff]
        %v1221 = vpack.c.bf16 %v1209, %v1205
        %v1222 = vpack.c.bf16 %v1210, %v1206
        %v1223 = vpack.c.bf16 %v1211, %v1207
        %v1224 = vpack.c.bf16 %v1212, %v1208
        %v1225 = vpack.c.bf16 %v1217, %v1213
        %v1226 = vpack.c.bf16 %v1218, %v1214
        %v1227 = vpack.c.bf16 %v1219, %v1215
        %v1228 = vpack.c.bf16 %v1220, %v1216
        %1229 = vmatprep.subr.bf16.mxu0 0
        %1230 = vmatpush1.bf16.msra.mxu0 0
        %1231 = vmatprep.subr.bf16.mxu0 0
        %1232 = vmatpush1.bf16.msra.mxu0 0
        %1233 = vmatprep.subr.bf16.mxu0 0
        %1234 = vmatpush1.bf16.msra.mxu0 0
        %1235 = vmatprep.subr.bf16.mxu0 0
        %1236 = vmatpush1.bf16.msra.mxu0 0
        %1237 = vmatprep.subr.bf16.mxu0 0
        %1238 = vmatpush1.bf16.msra.mxu0 0
        %1239 = vmatprep.subr.bf16.mxu0 0
        %1240 = vmatpush1.bf16.msra.mxu0 0
        %1241 = vmatprep.subr.bf16.mxu0 %v1226
        %1242 = vmatpush1.bf16.msra.mxu0 %v1225
        %1243 = vmatprep.subr.bf16.mxu0 %v1222
        %1244 = vmatpush1.bf16.msra.mxu0 %v1221
        %1245 = vmatprep.subr.bf16.mxu0 0
        %1246 = vmatpush2.bf16.msra.mxu0 0
        %1247 = vmatprep.subr.bf16.mxu0 0
        %1248 = vmatpush2.bf16.msra.mxu0 0
        %1249 = vmatprep.subr.bf16.mxu0 0
        %1250 = vmatpush2.bf16.msra.mxu0 0
        %1251 = vmatprep.subr.bf16.mxu0 0
        %1252 = vmatpush2.bf16.msra.mxu0 0
        %1253 = vmatprep.subr.bf16.mxu0 0
        %1254 = vmatpush2.bf16.msra.mxu0 0
        %1255 = vmatprep.subr.bf16.mxu0 0
        %1256 = vmatpush2.bf16.msra.mxu0 0
        %1257 = vmatprep.subr.bf16.mxu0 0
        %1258 = vmatpush2.bf16.msra.mxu0 0
        %1259 = vmatprep.subr.bf16.mxu0 0
        %1260 = vmatpush2.bf16.msra.mxu0 0
        %1261 = vmatprep.mubr.bf16.mxu0 0
        %1262 = vmatmul.mubr.bf16.gmra.mxu0 %v491
        %v1263 = vpop.f32.mrf.mxu0
        %v1264 = vadd.f32 %v432, %v1263
        %v1265 = vpop.f32.mrf.mxu0
        %v1266 = vadd.f32 %v432, %v1265
        %v1267 = vpop.f32.mrf.mxu0
        %v1268 = vadd.f32 %v437, %v1267
        %v1269 = vpop.f32.mrf.mxu0
        %v1270 = vadd.f32 %v437, %v1269
        %1271 = vmatprep.mubr.bf16.mxu0 0
        %1272 = vmatmul.mubr.bf16.gmra.mxu0 %v494
        %v1273 = vpop.f32.mrf.mxu0
        %v1274 = vadd.f32 %v442, %v1273
        %v1275 = vpop.f32.mrf.mxu0
        %v1276 = vadd.f32 %v442, %v1275
        %v1277 = vpop.f32.mrf.mxu0
        %v1278 = vadd.f32 %v447, %v1277
        %v1279 = vpop.f32.mrf.mxu0
        %v1280 = vadd.f32 %v447, %v1279
        %1281 = vmatprep.mubr.bf16.mxu0 0
        %1282 = vmatmul.mubr.bf16.gmra.mxu0 %v497
        %v1283 = vpop.f32.mrf.mxu0
        %v1284 = vadd.f32 %v452, %v1283
        %v1285 = vpop.f32.mrf.mxu0
        %v1286 = vadd.f32 %v452, %v1285
        %v1287 = vpop.f32.mrf.mxu0
        %v1288 = vadd.f32 %v457, %v1287
        %v1289 = vpop.f32.mrf.mxu0
        %v1290 = vadd.f32 %v457, %v1289
        %1291 = vmatprep.mubr.bf16.mxu0 0
        %1292 = vmatmul.mubr.bf16.gmra.mxu0 %v500
        %v1293 = vpop.f32.mrf.mxu0
        %v1294 = vadd.f32 %v462, %v1293
        %v1295 = vpop.f32.mrf.mxu0
        %v1296 = vadd.f32 %v462, %v1295
        %v1297 = vpop.f32.mrf.mxu0
        %v1298 = vadd.f32 %v467, %v1297
        %v1299 = vpop.f32.mrf.mxu0
        %v1300 = vadd.f32 %v467, %v1299
        %1301 = vdwg.mxu0
        %1302 = vmatprep.subr.bf16.mxu0 0
        %1303 = vmatpush1.bf16.msra.mxu0 0
        %1304 = vmatprep.subr.bf16.mxu0 0
        %1305 = vmatpush1.bf16.msra.mxu0 0
        %1306 = vmatprep.subr.bf16.mxu0 0
        %1307 = vmatpush1.bf16.msra.mxu0 0
        %1308 = vmatprep.subr.bf16.mxu0 0
        %1309 = vmatpush1.bf16.msra.mxu0 0
        %1310 = vmatprep.subr.bf16.mxu0 0
        %1311 = vmatpush1.bf16.msra.mxu0 0
        %1312 = vmatprep.subr.bf16.mxu0 0
        %1313 = vmatpush1.bf16.msra.mxu0 0
        %1314 = vmatprep.subr.bf16.mxu0 %v1228
        %1315 = vmatpush1.bf16.msra.mxu0 %v1227
        %1316 = vmatprep.subr.bf16.mxu0 %v1224
        %1317 = vmatpush1.bf16.msra.mxu0 %v1223
        %1318 = vmatprep.subr.bf16.mxu0 0
        %1319 = vmatpush2.bf16.msra.mxu0 0
        %1320 = vmatprep.subr.bf16.mxu0 0
        %1321 = vmatpush2.bf16.msra.mxu0 0
        %1322 = vmatprep.subr.bf16.mxu0 0
        %1323 = vmatpush2.bf16.msra.mxu0 0
        %1324 = vmatprep.subr.bf16.mxu0 0
        %1325 = vmatpush2.bf16.msra.mxu0 0
        %1326 = vmatprep.subr.bf16.mxu0 0
        %1327 = vmatpush2.bf16.msra.mxu0 0
        %1328 = vmatprep.subr.bf16.mxu0 0
        %1329 = vmatpush2.bf16.msra.mxu0 0
        %1330 = vmatprep.subr.bf16.mxu0 0
        %1331 = vmatpush2.bf16.msra.mxu0 0
        %1332 = vmatprep.subr.bf16.mxu0 0
        %1333 = vmatpush2.bf16.msra.mxu0 0
        %1334 = vmatprep.mubr.bf16.mxu0 0
        %1335 = vmatmul.mubr.bf16.gmra.mxu0 %v491
        %v1336 = vpop.f32.mrf.mxu0
        %v1337 = vadd.f32 %v432, %v1336
        %v1338 = vpop.f32.mrf.mxu0
        %v1339 = vadd.f32 %v432, %v1338
        %v1340 = vpop.f32.mrf.mxu0
        %v1341 = vadd.f32 %v437, %v1340
        %v1342 = vpop.f32.mrf.mxu0
        %v1343 = vadd.f32 %v437, %v1342
        %1344 = vmatprep.mubr.bf16.mxu0 0
        %1345 = vmatmul.mubr.bf16.gmra.mxu0 %v494
        %v1346 = vpop.f32.mrf.mxu0
        %v1347 = vadd.f32 %v442, %v1346
        %v1348 = vpop.f32.mrf.mxu0
        %v1349 = vadd.f32 %v442, %v1348
        %v1350 = vpop.f32.mrf.mxu0
        %v1351 = vadd.f32 %v447, %v1350
        %v1352 = vpop.f32.mrf.mxu0
        %v1353 = vadd.f32 %v447, %v1352
        %1354 = vmatprep.mubr.bf16.mxu0 0
        %1355 = vmatmul.mubr.bf16.gmra.mxu0 %v497
        %v1356 = vpop.f32.mrf.mxu0
        %v1357 = vadd.f32 %v452, %v1356
        %v1358 = vpop.f32.mrf.mxu0
        %v1359 = vadd.f32 %v452, %v1358
        %v1360 = vpop.f32.mrf.mxu0
        %v1361 = vadd.f32 %v457, %v1360
        %v1362 = vpop.f32.mrf.mxu0
        %v1363 = vadd.f32 %v457, %v1362
        %1364 = vmatprep.mubr.bf16.mxu0 0
        %1365 = vmatmul.mubr.bf16.gmra.mxu0 %v500
        %v1366 = vpop.f32.mrf.mxu0
        %v1367 = vadd.f32 %v462, %v1366
        %v1368 = vpop.f32.mrf.mxu0
        %v1369 = vadd.f32 %v462, %v1368
        %v1370 = vpop.f32.mrf.mxu0
        %v1371 = vadd.f32 %v467, %v1370
        %v1372 = vpop.f32.mrf.mxu0
        %v1373 = vadd.f32 %v467, %v1372
        %1374 = vdwg.mxu0
        %vm1375 = vcmp.gt.f32.partialorder %v1264, 0.0
        %vm1376 = vcmp.gt.f32.partialorder %v1266, 0.0
        %vm1377 = vcmp.gt.f32.partialorder %v1337, 0.0
        %vm1378 = vcmp.gt.f32.partialorder %v1339, 0.0
        %vm1379 = vcmp.gt.f32.partialorder %v1268, 0.0
        %vm1380 = vcmp.gt.f32.partialorder %v1270, 0.0
        %vm1381 = vcmp.gt.f32.partialorder %v1341, 0.0
        %vm1382 = vcmp.gt.f32.partialorder %v1343, 0.0
        %vm1383 = vcmp.gt.f32.partialorder %v1274, 0.0
        %vm1384 = vcmp.gt.f32.partialorder %v1276, 0.0
        %vm1385 = vcmp.gt.f32.partialorder %v1347, 0.0
        %vm1386 = vcmp.gt.f32.partialorder %v1349, 0.0
        %vm1387 = vcmp.gt.f32.partialorder %v1278, 0.0
        %vm1388 = vcmp.gt.f32.partialorder %v1280, 0.0
        %vm1389 = vcmp.gt.f32.partialorder %v1351, 0.0
        %vm1390 = vcmp.gt.f32.partialorder %v1353, 0.0
        %vm1391 = vcmp.gt.f32.partialorder %v1284, 0.0
        %vm1392 = vcmp.gt.f32.partialorder %v1286, 0.0
        %vm1393 = vcmp.gt.f32.partialorder %v1357, 0.0
        %vm1394 = vcmp.gt.f32.partialorder %v1359, 0.0
        %vm1395 = vcmp.gt.f32.partialorder %v1288, 0.0
        %vm1396 = vcmp.gt.f32.partialorder %v1290, 0.0
        %vm1397 = vcmp.gt.f32.partialorder %v1361, 0.0
        %vm1398 = vcmp.gt.f32.partialorder %v1363, 0.0
        %vm1399 = vcmp.gt.f32.partialorder %v1294, 0.0
        %vm1400 = vcmp.gt.f32.partialorder %v1296, 0.0
        %vm1401 = vcmp.gt.f32.partialorder %v1367, 0.0
        %vm1402 = vcmp.gt.f32.partialorder %v1369, 0.0
        %vm1403 = vcmp.gt.f32.partialorder %v1298, 0.0
        %vm1404 = vcmp.gt.f32.partialorder %v1300, 0.0
        %vm1405 = vcmp.gt.f32.partialorder %v1371, 0.0
        %vm1406 = vcmp.gt.f32.partialorder %v1373, 0.0
        %v1407 = vmul.f32 %v1264, 0.01
        %v1408 = vmul.f32 %v1266, 0.01
        %v1409 = vmul.f32 %v1337, 0.01
        %v1410 = vmul.f32 %v1339, 0.01
        %v1411 = vmul.f32 %v1268, 0.01
        %v1412 = vmul.f32 %v1270, 0.01
        %v1413 = vmul.f32 %v1341, 0.01
        %v1414 = vmul.f32 %v1343, 0.01
        %v1415 = vmul.f32 %v1274, 0.01
        %v1416 = vmul.f32 %v1276, 0.01
        %v1417 = vmul.f32 %v1347, 0.01
        %v1418 = vmul.f32 %v1349, 0.01
        %v1419 = vmul.f32 %v1278, 0.01
        %v1420 = vmul.f32 %v1280, 0.01
        %v1421 = vmul.f32 %v1351, 0.01
        %v1422 = vmul.f32 %v1353, 0.01
        %v1423 = vmul.f32 %v1284, 0.01
        %v1424 = vmul.f32 %v1286, 0.01
        %v1425 = vmul.f32 %v1357, 0.01
        %v1426 = vmul.f32 %v1359, 0.01
        %v1427 = vmul.f32 %v1288, 0.01
        %v1428 = vmul.f32 %v1290, 0.01
        %v1429 = vmul.f32 %v1361, 0.01
        %v1430 = vmul.f32 %v1363, 0.01
        %v1431 = vmul.f32 %v1294, 0.01
        %v1432 = vmul.f32 %v1296, 0.01
        %v1433 = vmul.f32 %v1367, 0.01
        %v1434 = vmul.f32 %v1369, 0.01
        %v1435 = vmul.f32 %v1298, 0.01
        %v1436 = vmul.f32 %v1300, 0.01
        %v1437 = vmul.f32 %v1371, 0.01
        %v1438 = vmul.f32 %v1373, 0.01
        %v1439 = vsel %vm1375, %v1264, %v1407
        %v1440 = vsel %vm1376, %v1266, %v1408
        %v1441 = vsel %vm1377, %v1337, %v1409
        %v1442 = vsel %vm1378, %v1339, %v1410
        %v1443 = vsel %vm1379, %v1268, %v1411
        %v1444 = vsel %vm1380, %v1270, %v1412
        %v1445 = vsel %vm1381, %v1341, %v1413
        %v1446 = vsel %vm1382, %v1343, %v1414
        %v1447 = vsel %vm1383, %v1274, %v1415
        %v1448 = vsel %vm1384, %v1276, %v1416
        %v1449 = vsel %vm1385, %v1347, %v1417
        %v1450 = vsel %vm1386, %v1349, %v1418
        %v1451 = vsel %vm1387, %v1278, %v1419
        %v1452 = vsel %vm1388, %v1280, %v1420
        %v1453 = vsel %vm1389, %v1351, %v1421
        %v1454 = vsel %vm1390, %v1353, %v1422
        %v1455 = vsel %vm1391, %v1284, %v1423
        %v1456 = vsel %vm1392, %v1286, %v1424
        %v1457 = vsel %vm1393, %v1357, %v1425
        %v1458 = vsel %vm1394, %v1359, %v1426
        %v1459 = vsel %vm1395, %v1288, %v1427
        %v1460 = vsel %vm1396, %v1290, %v1428
        %v1461 = vsel %vm1397, %v1361, %v1429
        %v1462 = vsel %vm1398, %v1363, %v1430
        %v1463 = vsel %vm1399, %v1294, %v1431
        %v1464 = vsel %vm1400, %v1296, %v1432
        %v1465 = vsel %vm1401, %v1367, %v1433
        %v1466 = vsel %vm1402, %v1369, %v1434
        %v1467 = vsel %vm1403, %v1298, %v1435
        %v1468 = vsel %vm1404, %v1300, %v1436
        %v1469 = vsel %vm1405, %v1371, %v1437
        %v1470 = vsel %vm1406, %v1373, %v1438
        %v1471 = vpack.c.bf16 %v1443, %v1439
        %v1472 = vpack.c.bf16 %v1444, %v1440
        %v1473 = vpack.c.bf16 %v1445, %v1441
        %v1474 = vpack.c.bf16 %v1446, %v1442
        %v1475 = vpack.c.bf16 %v1451, %v1447
        %v1476 = vpack.c.bf16 %v1452, %v1448
        %v1477 = vpack.c.bf16 %v1453, %v1449
        %v1478 = vpack.c.bf16 %v1454, %v1450
        %v1479 = vpack.c.bf16 %v1459, %v1455
        %v1480 = vpack.c.bf16 %v1460, %v1456
        %v1481 = vpack.c.bf16 %v1461, %v1457
        %v1482 = vpack.c.bf16 %v1462, %v1458
        %v1483 = vpack.c.bf16 %v1467, %v1463
        %v1484 = vpack.c.bf16 %v1468, %v1464
        %v1485 = vpack.c.bf16 %v1469, %v1465
        %v1486 = vpack.c.bf16 %v1470, %v1466
        %1487 = vmatprep.subr.bf16.mxu0 0
        %1488 = vmatpush1.bf16.msra.mxu0 0
        %1489 = vmatprep.subr.bf16.mxu0 0
        %1490 = vmatpush1.bf16.msra.mxu0 0
        %1491 = vmatprep.subr.bf16.mxu0 0
        %1492 = vmatpush1.bf16.msra.mxu0 0
        %1493 = vmatprep.subr.bf16.mxu0 0
        %1494 = vmatpush1.bf16.msra.mxu0 0
        %1495 = vmatprep.subr.bf16.mxu0 %v1484
        %1496 = vmatpush1.bf16.msra.mxu0 %v1483
        %1497 = vmatprep.subr.bf16.mxu0 %v1480
        %1498 = vmatpush1.bf16.msra.mxu0 %v1479
        %1499 = vmatprep.subr.bf16.mxu0 %v1476
        %1500 = vmatpush1.bf16.msra.mxu0 %v1475
        %1501 = vmatprep.subr.bf16.mxu0 %v1472
        %1502 = vmatpush1.bf16.msra.mxu0 %v1471
        %1503 = vmatprep.subr.bf16.mxu0 0
        %1504 = vmatpush2.bf16.msra.mxu0 0
        %1505 = vmatprep.subr.bf16.mxu0 0
        %1506 = vmatpush2.bf16.msra.mxu0 0
        %1507 = vmatprep.subr.bf16.mxu0 0
        %1508 = vmatpush2.bf16.msra.mxu0 0
        %1509 = vmatprep.subr.bf16.mxu0 0
        %1510 = vmatpush2.bf16.msra.mxu0 0
        %1511 = vmatprep.subr.bf16.mxu0 0
        %1512 = vmatpush2.bf16.msra.mxu0 0
        %1513 = vmatprep.subr.bf16.mxu0 0
        %1514 = vmatpush2.bf16.msra.mxu0 0
        %1515 = vmatprep.subr.bf16.mxu0 0
        %1516 = vmatpush2.bf16.msra.mxu0 0
        %1517 = vmatprep.subr.bf16.mxu0 0
        %1518 = vmatpush2.bf16.msra.mxu0 0
        %1519 = vmatprep.mubr.bf16.mxu0 0
        %1520 = vmatmul.mubr.bf16.gmra.mxu0 %v792
        %v1521 = vpop.f32.mrf.mxu0
        %v1522 = vadd.f32 %v763, %v1521
        %v1523 = vpop.f32.mrf.mxu0
        %v1524 = vadd.f32 %v763, %v1523
        %v1525 = vpop.f32.mrf.mxu0
        %v1526 = vadd.f32 %v768, %v1525
        %v1527 = vpop.f32.mrf.mxu0
        %v1528 = vadd.f32 %v768, %v1527
        %1529 = vmatprep.mubr.bf16.mxu0 0
        %1530 = vmatmul.mubr.bf16.gmra.mxu0 %v795
        %v1531 = vpop.f32.mrf.mxu0
        %v1532 = vadd.f32 %v773, %v1531
        %v1533 = vpop.f32.mrf.mxu0
        %v1534 = vadd.f32 %v773, %v1533
        %v1535 = vpop.f32.mrf.mxu0
        %v1536 = vadd.f32 %v778, %v1535
        %v1537 = vpop.f32.mrf.mxu0
        %v1538 = vadd.f32 %v778, %v1537
        %1539 = vdwg.mxu0
        %1540 = vmatprep.subr.bf16.mxu0 0
        %1541 = vmatpush1.bf16.msra.mxu0 0
        %1542 = vmatprep.subr.bf16.mxu0 0
        %1543 = vmatpush1.bf16.msra.mxu0 0
        %1544 = vmatprep.subr.bf16.mxu0 0
        %1545 = vmatpush1.bf16.msra.mxu0 0
        %1546 = vmatprep.subr.bf16.mxu0 0
        %1547 = vmatpush1.bf16.msra.mxu0 0
        %1548 = vmatprep.subr.bf16.mxu0 %v1486
        %1549 = vmatpush1.bf16.msra.mxu0 %v1485
        %1550 = vmatprep.subr.bf16.mxu0 %v1482
        %1551 = vmatpush1.bf16.msra.mxu0 %v1481
        %1552 = vmatprep.subr.bf16.mxu0 %v1478
        %1553 = vmatpush1.bf16.msra.mxu0 %v1477
        %1554 = vmatprep.subr.bf16.mxu0 %v1474
        %1555 = vmatpush1.bf16.msra.mxu0 %v1473
        %1556 = vmatprep.subr.bf16.mxu0 0
        %1557 = vmatpush2.bf16.msra.mxu0 0
        %1558 = vmatprep.subr.bf16.mxu0 0
        %1559 = vmatpush2.bf16.msra.mxu0 0
        %1560 = vmatprep.subr.bf16.mxu0 0
        %1561 = vmatpush2.bf16.msra.mxu0 0
        %1562 = vmatprep.subr.bf16.mxu0 0
        %1563 = vmatpush2.bf16.msra.mxu0 0
        %1564 = vmatprep.subr.bf16.mxu0 0
        %1565 = vmatpush2.bf16.msra.mxu0 0
        %1566 = vmatprep.subr.bf16.mxu0 0
        %1567 = vmatpush2.bf16.msra.mxu0 0
        %1568 = vmatprep.subr.bf16.mxu0 0
        %1569 = vmatpush2.bf16.msra.mxu0 0
        %1570 = vmatprep.subr.bf16.mxu0 0
        %1571 = vmatpush2.bf16.msra.mxu0 0
        %1572 = vmatprep.mubr.bf16.mxu0 0
        %1573 = vmatmul.mubr.bf16.gmra.mxu0 %v792
        %v1574 = vpop.f32.mrf.mxu0
        %v1575 = vadd.f32 %v763, %v1574
        %v1576 = vpop.f32.mrf.mxu0
        %v1577 = vadd.f32 %v763, %v1576
        %v1578 = vpop.f32.mrf.mxu0
        %v1579 = vadd.f32 %v768, %v1578
        %v1580 = vpop.f32.mrf.mxu0
        %v1581 = vadd.f32 %v768, %v1580
        %1582 = vmatprep.mubr.bf16.mxu0 0
        %1583 = vmatmul.mubr.bf16.gmra.mxu0 %v795
        %v1584 = vpop.f32.mrf.mxu0
        %v1585 = vadd.f32 %v773, %v1584
        %v1586 = vpop.f32.mrf.mxu0
        %v1587 = vadd.f32 %v773, %v1586
        %v1588 = vpop.f32.mrf.mxu0
        %v1589 = vadd.f32 %v778, %v1588
        %v1590 = vpop.f32.mrf.mxu0
        %v1591 = vadd.f32 %v778, %v1590
        %1592 = vdwg.mxu0
        %vm1593 = vcmp.gt.f32.partialorder %v1522, 0.0
        %vm1594 = vcmp.gt.f32.partialorder %v1524, 0.0
        %vm1595 = vcmp.gt.f32.partialorder %v1575, 0.0
        %vm1596 = vcmp.gt.f32.partialorder %v1577, 0.0
        %vm1597 = vcmp.gt.f32.partialorder %v1526, 0.0
        %vm1598 = vcmp.gt.f32.partialorder %v1528, 0.0
        %vm1599 = vcmp.gt.f32.partialorder %v1579, 0.0
        %vm1600 = vcmp.gt.f32.partialorder %v1581, 0.0
        %vm1601 = vcmp.gt.f32.partialorder %v1532, 0.0
        %vm1602 = vcmp.gt.f32.partialorder %v1534, 0.0
        %vm1603 = vcmp.gt.f32.partialorder %v1585, 0.0
        %vm1604 = vcmp.gt.f32.partialorder %v1587, 0.0
        %vm1605 = vcmp.gt.f32.partialorder %v1536, 0.0
        %vm1606 = vcmp.gt.f32.partialorder %v1538, 0.0
        %vm1607 = vcmp.gt.f32.partialorder %v1589, 0.0
        %vm1608 = vcmp.gt.f32.partialorder %v1591, 0.0
        %v1609 = vmul.f32 %v1522, 0.01
        %v1610 = vmul.f32 %v1524, 0.01
        %v1611 = vmul.f32 %v1575, 0.01
        %v1612 = vmul.f32 %v1577, 0.01
        %v1613 = vmul.f32 %v1526, 0.01
        %v1614 = vmul.f32 %v1528, 0.01
        %v1615 = vmul.f32 %v1579, 0.01
        %v1616 = vmul.f32 %v1581, 0.01
        %v1617 = vmul.f32 %v1532, 0.01
        %v1618 = vmul.f32 %v1534, 0.01
        %v1619 = vmul.f32 %v1585, 0.01
        %v1620 = vmul.f32 %v1587, 0.01
        %v1621 = vmul.f32 %v1536, 0.01
        %v1622 = vmul.f32 %v1538, 0.01
        %v1623 = vmul.f32 %v1589, 0.01
        %v1624 = vmul.f32 %v1591, 0.01
        %v1625 = vsel %vm1593, %v1522, %v1609
        %v1626 = vsel %vm1594, %v1524, %v1610
        %v1627 = vsel %vm1595, %v1575, %v1611
        %v1628 = vsel %vm1596, %v1577, %v1612
        %v1629 = vsel %vm1597, %v1526, %v1613
        %v1630 = vsel %vm1598, %v1528, %v1614
        %v1631 = vsel %vm1599, %v1579, %v1615
        %v1632 = vsel %vm1600, %v1581, %v1616
        %v1633 = vsel %vm1601, %v1532, %v1617
        %v1634 = vsel %vm1602, %v1534, %v1618
        %v1635 = vsel %vm1603, %v1585, %v1619
        %v1636 = vsel %vm1604, %v1587, %v1620
        %v1637 = vsel %vm1605, %v1536, %v1621
        %v1638 = vsel %vm1606, %v1538, %v1622
        %v1639 = vsel %vm1607, %v1589, %v1623
        %v1640 = vsel %vm1608, %v1591, %v1624
        %v1641 = vpack.c.bf16 %v1629, %v1625
        %v1642 = vpack.c.bf16 %v1630, %v1626
        %v1643 = vpack.c.bf16 %v1631, %v1627
        %v1644 = vpack.c.bf16 %v1632, %v1628
        %v1645 = vpack.c.bf16 %v1637, %v1633
        %v1646 = vpack.c.bf16 %v1638, %v1634
        %v1647 = vpack.c.bf16 %v1639, %v1635
        %v1648 = vpack.c.bf16 %v1640, %v1636
        %1649 = vmatprep.subr.bf16.mxu0 0
        %1650 = vmatpush1.bf16.msra.mxu0 0
        %1651 = vmatprep.subr.bf16.mxu0 0
        %1652 = vmatpush1.bf16.msra.mxu0 0
        %1653 = vmatprep.subr.bf16.mxu0 0
        %1654 = vmatpush1.bf16.msra.mxu0 0
        %1655 = vmatprep.subr.bf16.mxu0 0
        %1656 = vmatpush1.bf16.msra.mxu0 0
        %1657 = vmatprep.subr.bf16.mxu0 0
        %1658 = vmatpush1.bf16.msra.mxu0 0
        %1659 = vmatprep.subr.bf16.mxu0 0
        %1660 = vmatpush1.bf16.msra.mxu0 0
        %1661 = vmatprep.subr.bf16.mxu0 %v1646
        %1662 = vmatpush1.bf16.msra.mxu0 %v1645
        %1663 = vmatprep.subr.bf16.mxu0 %v1642
        %1664 = vmatpush1.bf16.msra.mxu0 %v1641
        %1665 = vmatprep.subr.bf16.mxu0 0
        %1666 = vmatpush2.bf16.msra.mxu0 0
        %1667 = vmatprep.subr.bf16.mxu0 0
        %1668 = vmatpush2.bf16.msra.mxu0 0
        %1669 = vmatprep.subr.bf16.mxu0 0
        %1670 = vmatpush2.bf16.msra.mxu0 0
        %1671 = vmatprep.subr.bf16.mxu0 0
        %1672 = vmatpush2.bf16.msra.mxu0 0
        %1673 = vmatprep.subr.bf16.mxu0 0
        %1674 = vmatpush2.bf16.msra.mxu0 0
        %1675 = vmatprep.subr.bf16.mxu0 0
        %1676 = vmatpush2.bf16.msra.mxu0 0
        %1677 = vmatprep.subr.bf16.mxu0 0
        %1678 = vmatpush2.bf16.msra.mxu0 0
        %1679 = vmatprep.subr.bf16.mxu0 0
        %1680 = vmatpush2.bf16.msra.mxu0 0
        %1681 = vmatprep.mubr.bf16.mxu0 0
        %1682 = vmatmul.mubr.bf16.gmra.mxu0 %v975
        %v1683 = vpop.f32.mrf.mxu0
        %v1684 = vadd.f32 %v962, %v1683
        %v1685 = vpop.f32.mrf.mxu0
        %v1686 = vadd.f32 %v962, %v1685
        %v1687 = vpop.f32.mrf.mxu0
        %v1688 = vadd.f32 %v967, %v1687
        %v1689 = vpop.f32.mrf.mxu0
        %v1690 = vadd.f32 %v967, %v1689
        %1691 = vdwg.mxu0
        %1692 = vmatprep.subr.bf16.mxu0 0
        %1693 = vmatpush1.bf16.msra.mxu0 0
        %1694 = vmatprep.subr.bf16.mxu0 0
        %1695 = vmatpush1.bf16.msra.mxu0 0
        %1696 = vmatprep.subr.bf16.mxu0 0
        %1697 = vmatpush1.bf16.msra.mxu0 0
        %1698 = vmatprep.subr.bf16.mxu0 0
        %1699 = vmatpush1.bf16.msra.mxu0 0
        %1700 = vmatprep.subr.bf16.mxu0 0
        %1701 = vmatpush1.bf16.msra.mxu0 0
        %1702 = vmatprep.subr.bf16.mxu0 0
        %1703 = vmatpush1.bf16.msra.mxu0 0
        %1704 = vmatprep.subr.bf16.mxu0 %v1648
        %1705 = vmatpush1.bf16.msra.mxu0 %v1647
        %1706 = vmatprep.subr.bf16.mxu0 %v1644
        %1707 = vmatpush1.bf16.msra.mxu0 %v1643
        %1708 = vmatprep.subr.bf16.mxu0 0
        %1709 = vmatpush2.bf16.msra.mxu0 0
        %1710 = vmatprep.subr.bf16.mxu0 0
        %1711 = vmatpush2.bf16.msra.mxu0 0
        %1712 = vmatprep.subr.bf16.mxu0 0
        %1713 = vmatpush2.bf16.msra.mxu0 0
        %1714 = vmatprep.subr.bf16.mxu0 0
        %1715 = vmatpush2.bf16.msra.mxu0 0
        %1716 = vmatprep.subr.bf16.mxu0 0
        %1717 = vmatpush2.bf16.msra.mxu0 0
        %1718 = vmatprep.subr.bf16.mxu0 0
        %1719 = vmatpush2.bf16.msra.mxu0 0
        %1720 = vmatprep.subr.bf16.mxu0 0
        %1721 = vmatpush2.bf16.msra.mxu0 0
        %1722 = vmatprep.subr.bf16.mxu0 0
        %1723 = vmatpush2.bf16.msra.mxu0 0
        %1724 = vmatprep.mubr.bf16.mxu0 0
        %1725 = vmatmul.mubr.bf16.gmra.mxu0 %v975
        %v1726 = vpop.f32.mrf.mxu0
        %v1727 = vadd.f32 %v962, %v1726
        %v1728 = vpop.f32.mrf.mxu0
        %v1729 = vadd.f32 %v962, %v1728
        %v1730 = vpop.f32.mrf.mxu0
        %v1731 = vadd.f32 %v967, %v1730
        %v1732 = vpop.f32.mrf.mxu0
        %v1733 = vadd.f32 %v967, %v1732
        %1734 = vdwg.mxu0
        %vm1735 = vcmp.gt.f32.partialorder %v1684, 0.0
        %vm1736 = vcmp.gt.f32.partialorder %v1686, 0.0
        %vm1737 = vcmp.gt.f32.partialorder %v1727, 0.0
        %vm1738 = vcmp.gt.f32.partialorder %v1729, 0.0
        %vm1739 = vcmp.gt.f32.partialorder %v1688, 0.0
        %vm1740 = vcmp.gt.f32.partialorder %v1690, 0.0
        %vm1741 = vcmp.gt.f32.partialorder %v1731, 0.0
        %vm1742 = vcmp.gt.f32.partialorder %v1733, 0.0
        %v1743 = vmul.f32 %v1684, 0.01
        %v1744 = vmul.f32 %v1686, 0.01
        %v1745 = vmul.f32 %v1727, 0.01
        %v1746 = vmul.f32 %v1729, 0.01
        %v1747 = vmul.f32 %v1688, 0.01
        %v1748 = vmul.f32 %v1690, 0.01
        %v1749 = vmul.f32 %v1731, 0.01
        %v1750 = vmul.f32 %v1733, 0.01
        %v1751 = vsel %vm1735, %v1684, %v1743
        %v1752 = vsel %vm1736, %v1686, %v1744
        %v1753 = vsel %vm1737, %v1727, %v1745
        %v1754 = vsel %vm1738, %v1729, %v1746
        %v1755 = vsel %vm1739, %v1688, %v1747
        %v1756 = vsel %vm1740, %v1690, %v1748
        %v1757 = vsel %vm1741, %v1731, %v1749
        %v1758 = vsel %vm1742, %v1733, %v1750
        %v1759 = vmul.f32 %v1090, %v1751
        %v1760 = vmul.f32 %v1090, %v1752
        %v1761 = vmul.f32 %v1090, %v1753
        %v1762 = vmul.f32 %v1090, %v1754
        %v1763 = vmul.f32 %v1095, %v1755
        %v1764 = vmul.f32 %v1095, %v1756
        %v1765 = vmul.f32 %v1095, %v1757
        %v1766 = vmul.f32 %v1095, %v1758
        %v1767 = vadd.f32 %v1759, %v1763
        %v1768 = vrot.slane %v1767, 4
        %v1769 = vadd.f32 %v1767, %v1768
        %v1770 = vrot.slane %v1769, 2
        %v1771 = vadd.f32 %v1769, %v1770
        %v1772 = vrot.slane %v1771, 1
        %v1773 = vadd.f32 %v1771, %v1772
        %v1774 = vadd.f32 %v1760, %v1764
        %v1775 = vrot.slane %v1774, 4
        %v1776 = vadd.f32 %v1774, %v1775
        %v1777 = vrot.slane %v1776, 2
        %v1778 = vadd.f32 %v1776, %v1777
        %v1779 = vrot.slane %v1778, 1
        %v1780 = vadd.f32 %v1778, %v1779
        %v1781 = vadd.f32 %v1761, %v1765
        %v1782 = vrot.slane %v1781, 4
        %v1783 = vadd.f32 %v1781, %v1782
        %v1784 = vrot.slane %v1783, 2
        %v1785 = vadd.f32 %v1783, %v1784
        %v1786 = vrot.slane %v1785, 1
        %v1787 = vadd.f32 %v1785, %v1786
        %v1788 = vadd.f32 %v1762, %v1766
        %v1789 = vrot.slane %v1788, 4
        %v1790 = vadd.f32 %v1788, %v1789
        %v1791 = vrot.slane %v1790, 2
        %v1792 = vadd.f32 %v1790, %v1791
        %v1793 = vrot.slane %v1792, 1
        %v1794 = vadd.f32 %v1792, %v1793
        %v1795 = vadd.f32 %v1773, %v1141
        %v1796 = vadd.f32 %v1780, %v1141
        %v1797 = vadd.f32 %v1787, %v1141
        %v1798 = vadd.f32 %v1794, %v1141
        %v1799 = vxor.u32 %v1795, 2147483648
        %v1800 = vxor.u32 %v1796, 2147483648
        %v1801 = vxor.u32 %v1797, 2147483648
        %v1802 = vxor.u32 %v1798, 2147483648
        %v1803 = vmul.f32 %v1799, 1.442695
        %v1804 = vpow.pop %v1803
        %v1805 = vmul.f32 %v1800, 1.442695
        %v1806 = vpow.pop %v1805
        %v1807 = vmul.f32 %v1801, 1.442695
        %v1808 = vpow.pop %v1807
        %v1809 = vmul.f32 %v1802, 1.442695
        %v1810 = vpow.pop %v1809
        %v1811 = vadd.f32 %v1804, 1.0
        %v1812 = vadd.f32 %v1806, 1.0
        %v1813 = vadd.f32 %v1808, 1.0
        %v1814 = vadd.f32 %v1810, 1.0
        %v1815 = vrcp.pop %v1811
        %v1816 = vmul.f32 1.0, %v1815
        %v1817 = vrcp.pop %v1812
        %v1818 = vmul.f32 1.0, %v1817
        %v1819 = vrcp.pop %v1813
        %v1820 = vmul.f32 1.0, %v1819
        %v1821 = vrcp.pop %v1814
        %v1822 = vmul.f32 1.0, %v1821
        %v1827 = vcombine.low %v1816, %v1818
        %v1828 = vcombine.low %v1820, %v1822
        %v1830 = vunpack.c.l.s4 1966171168
        %v1831 = vunpack.c.0.s8 %v1830
        %v1832 = vlaneseq
        %v1833 = vshrl.u32 %v1832, 7
        %v1834 = vsub.s32 %v1831, %v1833
        %v1835 = vrot.slane %v1827, %v1834
        %v1837 = vunpack.c.l.s4 1966171168
        %v1838 = vunpack.c.0.s8 %v1837
        %v1839 = vlaneseq
        %v1840 = vshrl.u32 %v1839, 7
        %v1841 = vsub.s32 %v1838, %v1840
        %v1842 = vrot.slane %v1828, %v1841
        %v1843 = vcombine.low %v1835, %v1842
        %v1845 = vunpack.c.l.s4 1966171168
        %v1846 = vunpack.c.0.s8 %v1845
        %v1847 = vlaneseq
        %v1848 = vshrl.u32 %v1847, 7
        %v1849 = vsub.s32 %v1846, %v1848
        %v1850 = vrot.slane %v1843, %v1849
        %s1852 = scalar_lea.vmem %s370, 4 [#allocation6]
        %1853 = vst.msk [vmem:[%s1852] sm:$0xf] %vm1202, %v1850
        %s1854 = sand.u32 %s246, 1
        %s1855 = scalar_lea.sflag [#allocation5], %s1854
        %s1856 = sand.u32 %s246, 1
        %s1857 = smul.addr %s1856, 8
        %s1858 = scalar_lea.vmem [#allocation6], %s1857
        // Predicated region
        $region61: #{tpu_custom_call.1} parent=55 // pred_check
          %p1859 = pneg %p256
        $region62: #{tpu_custom_call.1} parent=55 // pred_check_branch
          %1861 = sbr.rel (%p1859) target = $region64
        $region63: #{tpu_custom_call.1} parent=55 // pred_region
          %s1862 = smul.u32 8, %s33
          %s1864 = ssub.s32 128, 128
          %1865 = vsyncadd %s1855, %s1864
          %s1866 = smul.addr %s32, 8
          %s1867 = sadd.s32 %s1862, %s1866
          %s1868 = smul.addr %s1867, 16
          %s1869 = scalar_lea.hbm %s9, %s1868
          %s1871 = sshll.u32 %s1858, 4
          %s1872 = int_to_ptr.vmem [resolvable:$true] %s1871
          %1874 = dma.vmem_to_hbm [thread:$0]  %s1872, 128, %s1869, %s1855
        $region64: #{tpu_custom_call.1} parent=55 // pred_fallthru
          _
      $region56: #{tpu_custom_call.1} parent=5 // pred_fallthru
        _
      %p1875 = scmp.le.s32.totalorder 2, %s23
      // Predicated region
      $region65: #{tpu_custom_call.1} parent=5 // pred_check
        %p1876 = pneg %p1875
      $region66: #{tpu_custom_call.1} parent=5 // pred_check_branch
        %1878 = sbr.rel (%p1876) target = $region68
      $region67: #{tpu_custom_call.1} parent=5 // pred_region
        %s1879 = ssub.s32 %s23, 2
        // Predicated region
        $region69: #{tpu_custom_call.1} parent=67 // pred_check
          %p1880 = pneg %p262
        $region70: #{tpu_custom_call.1} parent=67 // pred_check_branch
          %1882 = sbr.rel (%p1880) target = $region72
        $region71: #{tpu_custom_call.1} parent=67 // pred_region
          %s1883 = sand.u32 %s247, 1
          %s1884 = scalar_lea.sflag [#allocation5], %s1883
          %s1885 = sand.u32 %s247, 1
          %s1886 = smul.addr %s1885, 8
          %s1887 = scalar_lea.vmem [#allocation6], %s1886
          %1888 = dma.done %s1884, 128
        $region72: #{tpu_custom_call.1} parent=67 // pred_fallthru
          _
      $region68: #{tpu_custom_call.1} parent=5 // pred_fallthru
        _
    $region6: #{tpu_custom_call.1} parent=1 // loop_footer
      %s27 = sadd.s32 1, %s23
    $region7: #{tpu_custom_call.1} parent=1 // loop_footer_branch
      %22 = sbr.rel target = $region3
    $region8: #{tpu_custom_call.1} parent=1 // loop_exit
      _
    %1889 = vsyncpa [#allocation4], 1
    %s1890 = scalar_lea.sflag [#allocation4], 1
    %1891 = vsyncpa %s1890, 1
    %1892 = vsyncpa [#allocation5], 1
    %s1893 = scalar_lea.sflag [#allocation5], 1
    %1894 = vsyncpa %s1893, 1

</llo_original>
